<compile_context>
chip_gen: v6e
topology: v6e:2x2x1
jax: 0.10.0
libtpu: 0.0.40
codegen_flags: <defaults>
</compile_context>

<pallas_src>
import functools

import jax
import jax.numpy as jnp
from jax.experimental import pallas as pl
from jax.experimental.pallas import tpu as pltpu

SE_REDUCTION = 16


def _round_up(v, m):
    return ((v + m - 1) // m) * m


def _pick_c_tile(c, cap=512):
    """Channel tile: full if small, else the largest 128-multiple divisor <= cap."""
    if c <= cap:
        return c
    for cand in (512, 256, 128):
        if cand <= cap and c % cand == 0:
            return cand
    return c


# ----------------------------- Pallas kernels ------------------------------

def _mm_fused_kernel(x_ref, w_ref, scale_ref, bias_ref, o_ref, acc_ref, *, activation):
    """Tiled  out = act((x @ w) * scale + bias), K-reduction grid axis last."""
    k = pl.program_id(2)

    @pl.when(k == 0)
    def _():
        acc_ref[...] = jnp.zeros_like(acc_ref)

    acc_ref[...] += jnp.dot(x_ref[...], w_ref[...], preferred_element_type=jnp.float32)

    @pl.when(k == pl.num_programs(2) - 1)
    def _():
        acc = acc_ref[...] * scale_ref[...] + bias_ref[...]
        if activation == "relu":
            acc = jnp.maximum(acc, 0.0)
        elif activation == "sigmoid":
            acc = jax.nn.sigmoid(acc)
        o_ref[...] = acc.astype(o_ref.dtype)


def matmul_scale_bias_act(x, w, scale, bias, activation="none", out_dtype=jnp.bfloat16):
    """(M,K) @ (K,N) with fused per-column scale/bias + activation (tiled Pallas)."""
    M, K = x.shape
    K2, N = w.shape
    assert K == K2

    # MXU-friendly tiles (multiples of 128 lanes; 16-sublane rows for bf16 packing).
    TM = min(512, _round_up(M, 16))
    TN = min(256, _round_up(N, 128))
    Kp0 = _round_up(K, 128)
    if Kp0 <= 2048:
        TK = Kp0                      # keep K whole (recommended for 1x1 convs)
    else:
        TK = 1024
        for cand in (2048, 1536, 1152, 1024):
            if Kp0 % cand == 0:
                TK = cand
                break
    Mp = _round_up(M, TM)
    Np = _round_up(N, TN)
    Kp = _round_up(Kp0, TK)

    xb = x.astype(jnp.bfloat16)
    wb = w.astype(jnp.bfloat16)
    if (Mp, Kp) != (M, K):
        xb = jnp.pad(xb, ((0, Mp - M), (0, Kp - K)))
    if (Kp, Np) != (K, N):
        wb = jnp.pad(wb, ((0, Kp - K), (0, Np - N)))
    scale2 = jnp.pad(scale.astype(jnp.float32), (0, Np - N)).reshape(1, Np)
    bias2 = jnp.pad(bias.astype(jnp.float32), (0, Np - N)).reshape(1, Np)

    kernel = functools.partial(_mm_fused_kernel, activation=activation)
    out = pl.pallas_call(
        kernel,
        out_shape=jax.ShapeDtypeStruct((Mp, Np), out_dtype),
        grid=(Mp // TM, Np // TN, Kp // TK),
        in_specs=[
            pl.BlockSpec((TM, TK), lambda i, j, k: (i, k)),
            pl.BlockSpec((TK, TN), lambda i, j, k: (k, j)),
            pl.BlockSpec((1, TN), lambda i, j, k: (0, j)),
            pl.BlockSpec((1, TN), lambda i, j, k: (0, j)),
        ],
        out_specs=pl.BlockSpec((TM, TN), lambda i, j, k: (i, j)),
        scratch_shapes=[pltpu.VMEM((TM, TN), jnp.float32)],
        compiler_params=pltpu.CompilerParams(
            dimension_semantics=("parallel", "parallel", "arbitrary")),
    )(xb, wb, scale2, bias2)

    if (Mp, Np) != (M, N):
        out = out[:M, :N]
    return out


def _gap_kernel(x_ref, o_ref, *, inv_hw):
    @pl.when(pl.program_id(1) == 0)
    def _():
        o_ref[...] = jnp.zeros_like(o_ref)
    o_ref[...] += jnp.sum(x_ref[...].astype(jnp.float32), axis=1) * inv_hw


def global_avg_pool(x):
    """(N, HW, C) -> (N, C) f32 mean over spatial; tiled over C (parallel) and HW (reduce)."""
    N, HW, C = x.shape
    THW = min(512, _round_up(HW, 16))
    HWp = _round_up(HW, THW)
    TC = _pick_c_tile(C)
    assert C % TC == 0
    xb = x.astype(jnp.bfloat16)
    if HWp != HW:
        xb = jnp.pad(xb, ((0, 0), (0, HWp - HW), (0, 0)))   # zeros do not change the sum
    kernel = functools.partial(_gap_kernel, inv_hw=1.0 / float(HW))
    return pl.pallas_call(
        kernel,
        out_shape=jax.ShapeDtypeStruct((N, C), jnp.float32),
        grid=(C // TC, HWp // THW),
        in_specs=[pl.BlockSpec((N, THW, TC), lambda c, h: (0, h, c))],
        out_specs=pl.BlockSpec((N, TC), lambda c, h: (0, c)),
        compiler_params=pltpu.CompilerParams(
            dimension_semantics=("parallel", "arbitrary")),
    )(xb)


def _se_mlp_kernel(s_ref, w1_ref, b1_ref, w2_ref, b2_ref, o_ref):
    h = jnp.dot(s_ref[...], w1_ref[...], preferred_element_type=jnp.float32)
    h = jnp.maximum(h + b1_ref[...], 0.0)
    g = jnp.dot(h.astype(w2_ref.dtype), w2_ref[...], preferred_element_type=jnp.float32)
    o_ref[...] = jax.nn.sigmoid(g + b2_ref[...]).astype(o_ref.dtype)


def se_mlp(s, w1, b1, w2, b2):
    """Fused SE MLP: sigmoid(relu(s @ w1 + b1) @ w2 + b2).  s:(N,C) -> gate (N,C)."""
    N, C = s.shape
    r = w1.shape[1]
    return pl.pallas_call(
        _se_mlp_kernel,
        out_shape=jax.ShapeDtypeStruct((N, C), jnp.bfloat16),
        grid=(1,),
        in_specs=[
            pl.BlockSpec((N, C), lambda i: (0, 0)),
            pl.BlockSpec((C, r), lambda i: (0, 0)),
            pl.BlockSpec((1, r), lambda i: (0, 0)),
            pl.BlockSpec((r, C), lambda i: (0, 0)),
            pl.BlockSpec((1, C), lambda i: (0, 0)),
        ],
        out_specs=pl.BlockSpec((N, C), lambda i: (0, 0)),
    )(s.astype(jnp.bfloat16), w1.astype(jnp.bfloat16),
      b1.reshape(1, r).astype(jnp.float32),
      w2.astype(jnp.bfloat16), b2.reshape(1, C).astype(jnp.float32))


def _se_residual_relu_kernel(x_ref, s_ref, r_ref, o_ref):
    s = s_ref[...].astype(jnp.float32)[:, None, :]          # (N,1,TC)
    v = x_ref[...].astype(jnp.float32) * s + r_ref[...].astype(jnp.float32)
    o_ref[...] = jnp.maximum(v, 0.0).astype(o_ref.dtype)


def se_scale_residual_relu(x, s, r):
    """relu(x * s[:,None,:] + r)   x,r:(N,HW,C)  s:(N,C); tiled over HW and C."""
    N, HW, C = x.shape
    THW = min(512, _round_up(HW, 16))
    HWp = _round_up(HW, THW)
    TC = _pick_c_tile(C)
    assert C % TC == 0
    xb = x.astype(jnp.bfloat16)
    rb = r.astype(jnp.bfloat16)
    if HWp != HW:
        pad = ((0, 0), (0, HWp - HW), (0, 0))
        xb = jnp.pad(xb, pad)
        rb = jnp.pad(rb, pad)
    out = pl.pallas_call(
        _se_residual_relu_kernel,
        out_shape=jax.ShapeDtypeStruct((N, HWp, C), jnp.bfloat16),
        grid=(HWp // THW, C // TC),
        in_specs=[
            pl.BlockSpec((N, THW, TC), lambda h, c: (0, h, c)),
            pl.BlockSpec((N, TC), lambda h, c: (0, c)),
            pl.BlockSpec((N, THW, TC), lambda h, c: (0, h, c)),
        ],
        out_specs=pl.BlockSpec((N, THW, TC), lambda h, c: (0, h, c)),
        compiler_params=pltpu.CompilerParams(
            dimension_semantics=("parallel", "parallel")),
    )(xb, s.astype(jnp.bfloat16), rb)
    if HWp != HW:
        out = out[:, :HW, :]
    return out


def _maxpool_kernel(p_ref, o_ref):
    o_ref[...] = jnp.max(p_ref[...].astype(jnp.float32), axis=1).astype(o_ref.dtype)


# ----------------------------- JAX glue (im2col etc.) ----------------------

def _extract_patches(x, k, stride, padding, pad_value=0.0):
    """x:(N,H,W,C) -> patches:(N,Ho,Wo,k*k,C) matching (kh,kw,C) flatten order."""
    N, H, W, C = x.shape
    Ho = (H + 2 * padding - k) // stride + 1
    Wo = (W + 2 * padding - k) // stride + 1
    xp = jnp.pad(x, ((0, 0), (padding, padding), (padding, padding), (0, 0)),
                 constant_values=pad_value)
    slices = []
    for di in range(k):
        for dj in range(k):
            sl = xp[:, di:di + stride * (Ho - 1) + 1:stride,
                       dj:dj + stride * (Wo - 1) + 1:stride, :]
            slices.append(sl)
    patches = jnp.stack(slices, axis=3)            # (N,Ho,Wo,k*k,C)
    return patches, Ho, Wo


def conv2d_bn_act(x, w, bn_scale, bn_bias, stride, padding, activation,
                  out_dtype=jnp.bfloat16):
    """x:(N,H,W,C), w:(k,k,Cin,Cout). Conv + folded BN + activation via Pallas matmul."""
    N, H, W, C = x.shape
    k, _, _, Cout = w.shape
    if k == 1 and padding == 0:
        # 1x1 conv: no im2col needed at all.
        xs = x[:, ::stride, ::stride, :] if stride != 1 else x
        Ho, Wo = xs.shape[1], xs.shape[2]
        cols = xs.reshape(N * Ho * Wo, C)
    else:
        patches, Ho, Wo = _extract_patches(x, k, stride, padding, 0.0)
        cols = patches.reshape(N * Ho * Wo, k * k * C)
    wmat = w.reshape(k * k * C, Cout)
    out = matmul_scale_bias_act(cols, wmat, bn_scale, bn_bias, activation, out_dtype)
    return out.reshape(N, Ho, Wo, Cout)


def maxpool2d(x, k=3, stride=2, padding=1):
    N, H, W, C = x.shape
    patches, Ho, Wo = _extract_patches(x, k, stride, padding, pad_value=-1e30)
    M = N * Ho * Wo
    p = patches.reshape(M, k * k, C)               # (M, KK, C) -- no HBM transpose
    TM = min(512, _round_up(M, 16))
    Mp = _round_up(M, TM)
    if Mp != M:
        p = jnp.pad(p, ((0, Mp - M), (0, 0), (0, 0)), constant_values=-1e30)
    out = pl.pallas_call(
        _maxpool_kernel,
        out_shape=jax.ShapeDtypeStruct((Mp, C), x.dtype),
        grid=(Mp // TM,),
        in_specs=[pl.BlockSpec((TM, k * k, C), lambda i: (i, 0, 0))],
        out_specs=pl.BlockSpec((TM, C), lambda i: (i, 0)),
        compiler_params=pltpu.CompilerParams(dimension_semantics=("parallel",)),
    )(p)
    if Mp != M:
        out = out[:M]
    return out.reshape(N, Ho, Wo, C)


# ----------------------------- parameter init ------------------------------

def _conv_w(key, k, cin, cout):
    return jax.random.normal(key, (k, k, cin, cout), jnp.float32) / jnp.sqrt(k * k * cin)


def _bn_params(key, c, eps=1e-5):
    k1, k2, k3, k4 = jax.random.split(key, 4)
    gamma = jax.random.uniform(k1, (c,), jnp.float32, 0.8, 1.2)
    beta = jax.random.normal(k2, (c,), jnp.float32) * 0.1
    mean = jax.random.normal(k3, (c,), jnp.float32) * 0.1
    var = jax.random.uniform(k4, (c,), jnp.float32, 0.8, 1.2)
    scale = gamma / jnp.sqrt(var + eps)
    bias = beta - mean * scale
    return scale, bias


def init_bottleneck(key, in_c, mid_c, stride):
    out_c = mid_c * 4
    keys = jax.random.split(key, 10)
    p = {"stride": stride}
    p["w1"], p["bn1"] = _conv_w(keys[0], 1, in_c, mid_c), _bn_params(keys[1], mid_c)
    p["w2"], p["bn2"] = _conv_w(keys[2], 3, mid_c, mid_c), _bn_params(keys[3], mid_c)
    p["w3"], p["bn3"] = _conv_w(keys[4], 1, mid_c, out_c), _bn_params(keys[5], out_c)
    r = max(out_c // SE_REDUCTION, 1)
    p["se_w1"] = jax.random.normal(keys[6], (out_c, r), jnp.float32) / jnp.sqrt(out_c)
    p["se_b1"] = jnp.zeros((r,), jnp.float32)
    p["se_w2"] = jax.random.normal(keys[7], (r, out_c), jnp.float32) / jnp.sqrt(r)
    p["se_b2"] = jnp.zeros((out_c,), jnp.float32)
    if stride != 1 or in_c != out_c:
        p["wd"], p["bnd"] = _conv_w(keys[8], 1, in_c, out_c), _bn_params(keys[9], out_c)
    return p


def init_seresnet(key, num_classes, blocknumlist):
    keys = jax.random.split(key, 4)
    params = {
        "conv1_w": _conv_w(keys[0], 7, 3, 64),
        "conv1_bn": _bn_params(keys[1], 64),
    }
    stage_cfg = [(64, blocknumlist[0], 1), (128, blocknumlist[1], 2),
                 (256, blocknumlist[2], 2), (512, blocknumlist[3], 2)]
    block_keys = jax.random.split(keys[2], sum(blocknumlist))
    in_c, bi, stages = 64, 0, []
    for mid_c, nblocks, stride in stage_cfg:
        blocks = []
        for st in [stride] + [1] * (nblocks - 1):
            blocks.append(init_bottleneck(block_keys[bi], in_c, mid_c, st))
            in_c = mid_c * 4
            bi += 1
        stages.append(blocks)
    params["stages"] = stages
    params["fc_w"] = jax.random.normal(keys[3], (512 * 4, num_classes), jnp.float32) / jnp.sqrt(512 * 4)
    params["fc_b"] = jnp.zeros((num_classes,), jnp.float32)
    return params


# ----------------------------- forward pass --------------------------------

def bottleneck_forward(p, x):
    out = conv2d_bn_act(x, p["w1"], *p["bn1"], stride=1, padding=0, activation="relu")
    out = conv2d_bn_act(out, p["w2"], *p["bn2"], stride=p["stride"], padding=1,
                        activation="relu")
    out = conv2d_bn_act(out, p["w3"], *p["bn3"], stride=1, padding=0, activation="none")

    N, Ho, Wo, Cout = out.shape
    out_flat = out.reshape(N, Ho * Wo, Cout)

    # Squeeze-and-Excitation (GAP + fused 2-layer MLP)
    s = global_avg_pool(out_flat)                                  # (N, Cout) f32
    gate = se_mlp(s, p["se_w1"], p["se_b1"], p["se_w2"], p["se_b2"])  # (N, Cout) bf16

    # shortcut
    if "wd" in p:
        sc = conv2d_bn_act(x, p["wd"], *p["bnd"], stride=p["stride"], padding=0,
                           activation="none")
    else:
        sc = x
    sc_flat = sc.reshape(N, Ho * Wo, Cout)

    y = se_scale_residual_relu(out_flat, gate, sc_flat)
    return y.reshape(N, Ho, Wo, Cout)


def seresnet_forward(params, x_nchw):
    x = jnp.transpose(x_nchw, (0, 2, 3, 1)).astype(jnp.bfloat16)   # NCHW -> NHWC, bf16
    # stem: conv7x7/2 + BN + ReLU + maxpool3x3/2
    x = conv2d_bn_act(x, params["conv1_w"], *params["conv1_bn"],
                      stride=2, padding=3, activation="relu")
    x = maxpool2d(x, 3, 2, 1)
    # stages
    for blocks in params["stages"]:
        for p in blocks:
            x = bottleneck_forward(p, x)
    # global average pool + fc (final output in f32)
    N, H, W, C = x.shape
    feat = global_avg_pool(x.reshape(N, H * W, C))                 # (N, 2048) f32
    out = matmul_scale_bias_act(feat, params["fc_w"],
                                jnp.ones((params["fc_w"].shape[1],), jnp.float32),
                                params["fc_b"], "none", out_dtype=jnp.float32)
    return out


# ----------------------------- main -----------------------------------------

if __name__ == "__main__":
    key = jax.random.PRNGKey(0)
    k_params, k_input = jax.random.split(key)

    num_classes = 10
    blocknumlist = [1, 1, 1, 1]          # small synthetic config (bottleneck type)
    params = init_seresnet(k_params, num_classes, blocknumlist)

    x = jax.random.normal(k_input, (2, 3, 32, 32), jnp.float32)   # NCHW like PyTorch

    out = seresnet_forward(params, x)
    out = jax.block_until_ready(out)

    assert out.shape == (2, num_classes), out.shape
    assert jnp.all(jnp.isfinite(out))
    print("KERNEL_OK")
</pallas_src>

<mosaic_0001>
module attributes {stable_mosaic.version = 11 : i64} {
  func.func @_mm_fused_kernel(%arg0: i32, %arg1: i32, %arg2: i32, %arg3: memref<512x256xbf16, #tpu.memory_space<vmem>>, %arg4: memref<256x128xbf16, #tpu.memory_space<vmem>>, %arg5: memref<1x128xf32, #tpu.memory_space<vmem>>, %arg6: memref<1x128xf32, #tpu.memory_space<vmem>>, %arg7: memref<512x128xbf16, #tpu.memory_space<vmem>>, %arg8: memref<512x128xf32, #tpu.memory_space<vmem>>) attributes {dimension_semantics = [#tpu.dimension_semantics<parallel>, #tpu.dimension_semantics<parallel>, #tpu.dimension_semantics<arbitrary>], iteration_bounds = array<i64: 1, 1, 1>, scalar_prefetch = 0 : i64, scratch_operands = 1 : i64, tpu.core_type = #tpu.core_type<tc>, window_params = [{transform_indices = @transform_0, window_bounds = array<i64: 512, 256>}, {transform_indices = @transform_1, window_bounds = array<i64: 256, 128>}, {transform_indices = @transform_2, window_bounds = array<i64: 1, 128>}, {transform_indices = @transform_3, window_bounds = array<i64: 1, 128>}, {transform_indices = @transform_4, window_bounds = array<i64: 512, 128>}]} {
    %c0_i32 = arith.constant 0 : i32
    %0 = arith.cmpi eq, %arg2, %c0_i32 : i32
    %1 = arith.extui %0 : i1 to i32
    %c0_i32_0 = arith.constant 0 : i32
    %2 = arith.cmpi ne, %1, %c0_i32_0 : i32
    scf.if %2 {
      %cst_10 = arith.constant 0.000000e+00 : f32
      %12 = vector.broadcast %cst_10 : f32 to vector<512x128xf32>
      %c0_11 = arith.constant 0 : index
      %c0_12 = arith.constant 0 : index
      %13 = vector.load %arg8[%c0_11, %c0_12] : memref<512x128xf32, #tpu.memory_space<vmem>>, vector<512x128xf32>
      tpu.vector_store %arg8[%c0_11, %c0_12], %12 {strides = array<i32>} : memref<512x128xf32, #tpu.memory_space<vmem>>, vector<512x128xf32>,
    } else {
    }
    %c0 = arith.constant 0 : index
    %c0_1 = arith.constant 0 : index
    %3 = vector.load %arg8[%c0, %c0_1] : memref<512x128xf32, #tpu.memory_space<vmem>>, vector<512x128xf32>
    %c0_2 = arith.constant 0 : index
    %c0_3 = arith.constant 0 : index
    %4 = vector.load %arg3[%c0_2, %c0_3] : memref<512x256xbf16, #tpu.memory_space<vmem>>, vector<512x256xbf16>
    %c0_4 = arith.constant 0 : index
    %c0_5 = arith.constant 0 : index
    %5 = vector.load %arg4[%c0_4, %c0_5] : memref<256x128xbf16, #tpu.memory_space<vmem>>, vector<256x128xbf16>
    %cst = arith.constant dense<0.000000e+00> : vector<512x128xf32>
    %6 = tpu.matmul %4, %5, %cst {dimension_numbers = #tpu.dot_dimension_numbers<[1], [0], [0], [1], [0, 0, 1, 1], [], []>} : vector<512x256xbf16>, vector<256x128xbf16>, vector<512x128xf32> -> vector<512x128xf32>
    %7 = arith.addf %3, %6 : vector<512x128xf32>
    %c0_6 = arith.constant 0 : index
    %c0_7 = arith.constant 0 : index
    %8 = vector.load %arg8[%c0_6, %c0_7] : memref<512x128xf32, #tpu.memory_space<vmem>>, vector<512x128xf32>
    tpu.vector_store %arg8[%c0_6, %c0_7], %7 {strides = array<i32>} : memref<512x128xf32, #tpu.memory_space<vmem>>, vector<512x128xf32>,
    %c0_i32_8 = arith.constant 0 : i32
    %9 = arith.cmpi eq, %arg2, %c0_i32_8 : i32
    %10 = arith.extui %9 : i1 to i32
    %c0_i32_9 = arith.constant 0 : i32
    %11 = arith.cmpi ne, %10, %c0_i32_9 : i32
    scf.if %11 {
      %c0_10 = arith.constant 0 : index
      %c0_11 = arith.constant 0 : index
      %12 = vector.load %arg8[%c0_10, %c0_11] : memref<512x128xf32, #tpu.memory_space<vmem>>, vector<512x128xf32>
      %c0_12 = arith.constant 0 : index
      %c0_13 = arith.constant 0 : index
      %13 = vector.load %arg5[%c0_12, %c0_13] : memref<1x128xf32, #tpu.memory_space<vmem>>, vector<1x128xf32>
      %14 = vector.broadcast %13 : vector<1x128xf32> to vector<512x128xf32>
      %15 = arith.mulf %12, %14 : vector<512x128xf32>
      %c0_14 = arith.constant 0 : index
      %c0_15 = arith.constant 0 : index
      %16 = vector.load %arg6[%c0_14, %c0_15] : memref<1x128xf32, #tpu.memory_space<vmem>>, vector<1x128xf32>
      %17 = vector.broadcast %16 : vector<1x128xf32> to vector<512x128xf32>
      %18 = arith.addf %15, %17 : vector<512x128xf32>
      %cst_16 = arith.constant 0.000000e+00 : f32
      %19 = vector.broadcast %cst_16 : f32 to vector<512x128xf32>
      %20 = arith.maximumf %18, %19 : vector<512x128xf32>
      %21 = arith.truncf %20 : vector<512x128xf32> to vector<512x128xbf16>
      %c0_17 = arith.constant 0 : index
      %c0_18 = arith.constant 0 : index
      %22 = vector.load %arg7[%c0_17, %c0_18] : memref<512x128xbf16, #tpu.memory_space<vmem>>, vector<512x128xbf16>
      tpu.vector_store %arg7[%c0_17, %c0_18], %21 {strides = array<i32>} : memref<512x128xbf16, #tpu.memory_space<vmem>>, vector<512x128xbf16>,
    } else {
    }
    return
  }
  func.func @transform_0(%arg0: i32, %arg1: i32, %arg2: i32) -> (i32, i32) {
    %c0_i32 = arith.constant 0 : i32
    return %arg0, %arg2 : i32, i32
  }
  func.func @transform_1(%arg0: i32, %arg1: i32, %arg2: i32) -> (i32, i32) {
    %c0_i32 = arith.constant 0 : i32
    return %arg2, %arg1 : i32, i32
  }
  func.func @transform_2(%arg0: i32, %arg1: i32, %arg2: i32) -> (i32, i32) {
    %c0_i32 = arith.constant 0 : i32
    %c0_i32_0 = arith.constant 0 : i32
    return %c0_i32, %arg1 : i32, i32
  }
  func.func @transform_3(%arg0: i32, %arg1: i32, %arg2: i32) -> (i32, i32) {
    %c0_i32 = arith.constant 0 : i32
    %c0_i32_0 = arith.constant 0 : i32
    return %c0_i32, %arg1 : i32, i32
  }
  func.func @transform_4(%arg0: i32, %arg1: i32, %arg2: i32) -> (i32, i32) {
    %c0_i32 = arith.constant 0 : i32
    return %arg0, %arg1 : i32, i32
  }
}

</mosaic_0001>

<llo_original>
// kernel: tpu_custom_call.1
$region0: #{tpu_custom_call.1}
  #allocation0 [shape = 'u32[]', space=smem, size = 0x4, offset = 0x4, fixed_abs, tag = 'smem constant byte address 0x4 - core index']
  #allocation1 [shape = 'u32[144,128]{1,0:T(1,128)}', space=vmem, size = 0x12000, scoped, tag = 'internal scratch']
  #allocation2 [shape = 'f32[512,128]{1,0:T(8,128)}', space=vmem, size = 0x40000, scoped, tag = 'scratch operand']
  %s0 = inlined_call_operand.hbm [shape: bf16[512,256], index: 0, kind: input, shape index: {}]
  %s1 = inlined_call_operand.hbm [shape: bf16[256,128], index: 1, kind: input, shape index: {}]
  %s2 = inlined_call_operand.vmem [shape: f32[1,128], index: 2, kind: input, shape index: {}]
  %s3 = inlined_call_operand.vmem [shape: f32[1,128], index: 3, kind: input, shape index: {}]
  %s4 = inlined_call_operand.hbm [shape: bf16[512,128], index: 4, kind: output, shape index: {}]
  %s5 = sld [smem:[#allocation0]]
  $region42: #{tpu_custom_call.1} parent=0
    _
  %s7 = ssub.s32 1, %s5
  %s8 = scalar_select 0, %s7, %s5
  $region1: #{tpu_custom_call.1} parent=0
    #allocation3 [shape = 'u8[262144]{0}', space=vmem, size = 0x40000, scoped, tag = 'input window, operand 0, single buffered']
    #allocation4 [shape = 's32[1]{0}', space=sflag, size = 0x4, scoped, tag = 'scoped memory for tpu_custom_call.1']
    #allocation5 [shape = 's32[1]{0}', space=sflag, size = 0x4, scoped, tag = 'scoped memory for tpu_custom_call.1']
    #allocation6 [shape = 'u8[65536]{0}', space=vmem, size = 0x10000, scoped, tag = 'input window, operand 1, single buffered']
    #allocation7 [shape = 's32[1]{0}', space=sflag, size = 0x4, scoped, tag = 'scoped memory for tpu_custom_call.1']
    #allocation8 [shape = 'u8[131072]{0}', space=vmem, size = 0x20000, scoped, tag = 'output window, operand 0, single buffered']
    %9 = vsyncpa [#allocation4], 0
    %10 = vsyncpa [#allocation7], 0
    %11 = vsyncpa [#allocation5], 0
    // Predicated region
    $region2: #{tpu_custom_call.1} parent=1 // pred_check
      _
    $region3: #{tpu_custom_call.1} parent=1 // pred_check_branch
      %13 = sbr.rel (0) target = $region5
    $region4: #{tpu_custom_call.1} parent=1 // pred_region
      %s15 = ssub.s32 8192, 8192
      %16 = vsyncadd [#allocation4], %s15
      %s17 = sshll.u32 [#allocation3], 4
      %s18 = int_to_ptr.vmem [resolvable:$true] %s17
      %23 = dma.hbm_to_vmem [thread:$0]  %s0, 8192, %s18, [#allocation4], 128, 128, 8
    $region5: #{tpu_custom_call.1} parent=1 // pred_fallthru
      _
    // Predicated region
    $region6: #{tpu_custom_call.1} parent=1 // pred_check
      _
    $region7: #{tpu_custom_call.1} parent=1 // pred_check_branch
      %25 = sbr.rel (0) target = $region9
    $region8: #{tpu_custom_call.1} parent=1 // pred_region
      %s27 = ssub.s32 2048, 2048
      %28 = vsyncadd [#allocation7], %s27
      %s29 = sshll.u32 [#allocation6], 4
      %s30 = int_to_ptr.vmem [resolvable:$true] %s29
      %35 = dma.hbm_to_vmem [thread:$0]  %s1, 2048, %s30, [#allocation7], 64, 64, 4
    $region9: #{tpu_custom_call.1} parent=1 // pred_fallthru
      _
    // Predicated region
    $region10: #{tpu_custom_call.1} parent=1 // pred_check
      _
    $region11: #{tpu_custom_call.1} parent=1 // pred_check_branch
      %37 = sbr.rel (0) target = $region13
    $region12: #{tpu_custom_call.1} parent=1 // pred_region
      _
    $region13: #{tpu_custom_call.1} parent=1 // pred_fallthru
      _
    // Predicated region
    $region14: #{tpu_custom_call.1} parent=1 // pred_check
      _
    $region15: #{tpu_custom_call.1} parent=1 // pred_check_branch
      %39 = sbr.rel (0) target = $region17
    $region16: #{tpu_custom_call.1} parent=1 // pred_region
      _
    $region17: #{tpu_custom_call.1} parent=1 // pred_fallthru
      _
    // Predicated region
    $region18: #{tpu_custom_call.1} parent=1 // pred_check
      _
    $region19: #{tpu_custom_call.1} parent=1 // pred_check_branch
      %41 = sbr.rel (0) target = $region21
    $region20: #{tpu_custom_call.1} parent=1 // pred_region
      %42 = dma.done [#allocation4], 8192
    $region21: #{tpu_custom_call.1} parent=1 // pred_fallthru
      _
    // Predicated region
    $region22: #{tpu_custom_call.1} parent=1 // pred_check
      _
    $region23: #{tpu_custom_call.1} parent=1 // pred_check_branch
      %44 = sbr.rel (0) target = $region25
    $region24: #{tpu_custom_call.1} parent=1 // pred_region
      %45 = dma.done [#allocation7], 2048
    $region25: #{tpu_custom_call.1} parent=1 // pred_fallthru
      _
    %p47 = scmp.eq.s32.totalorder 0, 0
    // Predicated region
    $region26: #{tpu_custom_call.1} parent=1 // pred_check
      %p48 = pneg %p47
    $region27: #{tpu_custom_call.1} parent=1 // pred_check_branch
      %50 = sbr.rel (%p48) target = $region29
    $region28: #{tpu_custom_call.1} parent=1 // pred_region
      %51 = vst [vmem:[#allocation2] sm:$0xff] 0.0
      %52 = vst [vmem:[#allocation2 + $0x8] sm:$0xff] 0.0
      %53 = vst [vmem:[#allocation2 + $0x10] sm:$0xff] 0.0
      %54 = vst [vmem:[#allocation2 + $0x18] sm:$0xff] 0.0
      %55 = vst [vmem:[#allocation2 + $0x20] sm:$0xff] 0.0
      %56 = vst [vmem:[#allocation2 + $0x28] sm:$0xff] 0.0
      %57 = vst [vmem:[#allocation2 + $0x30] sm:$0xff] 0.0
      %58 = vst [vmem:[#allocation2 + $0x38] sm:$0xff] 0.0
      %59 = vst [vmem:[#allocation2 + $0x40] sm:$0xff] 0.0
      %60 = vst [vmem:[#allocation2 + $0x48] sm:$0xff] 0.0
      %61 = vst [vmem:[#allocation2 + $0x50] sm:$0xff] 0.0
      %62 = vst [vmem:[#allocation2 + $0x58] sm:$0xff] 0.0
      %63 = vst [vmem:[#allocation2 + $0x60] sm:$0xff] 0.0
      %64 = vst [vmem:[#allocation2 + $0x68] sm:$0xff] 0.0
      %65 = vst [vmem:[#allocation2 + $0x70] sm:$0xff] 0.0
      %66 = vst [vmem:[#allocation2 + $0x78] sm:$0xff] 0.0
      %67 = vst [vmem:[#allocation2 + $0x80] sm:$0xff] 0.0
      %68 = vst [vmem:[#allocation2 + $0x88] sm:$0xff] 0.0
      %69 = vst [vmem:[#allocation2 + $0x90] sm:$0xff] 0.0
      %70 = vst [vmem:[#allocation2 + $0x98] sm:$0xff] 0.0
      %71 = vst [vmem:[#allocation2 + $0xa0] sm:$0xff] 0.0
      %72 = vst [vmem:[#allocation2 + $0xa8] sm:$0xff] 0.0
      %73 = vst [vmem:[#allocation2 + $0xb0] sm:$0xff] 0.0
      %74 = vst [vmem:[#allocation2 + $0xb8] sm:$0xff] 0.0
      %75 = vst [vmem:[#allocation2 + $0xc0] sm:$0xff] 0.0
      %76 = vst [vmem:[#allocation2 + $0xc8] sm:$0xff] 0.0
      %77 = vst [vmem:[#allocation2 + $0xd0] sm:$0xff] 0.0
      %78 = vst [vmem:[#allocation2 + $0xd8] sm:$0xff] 0.0
      %79 = vst [vmem:[#allocation2 + $0xe0] sm:$0xff] 0.0
      %80 = vst [vmem:[#allocation2 + $0xe8] sm:$0xff] 0.0
      %81 = vst [vmem:[#allocation2 + $0xf0] sm:$0xff] 0.0
      %82 = vst [vmem:[#allocation2 + $0xf8] sm:$0xff] 0.0
      %83 = vst [vmem:[#allocation2 + $0x100] sm:$0xff] 0.0
      %84 = vst [vmem:[#allocation2 + $0x108] sm:$0xff] 0.0
      %85 = vst [vmem:[#allocation2 + $0x110] sm:$0xff] 0.0
      %86 = vst [vmem:[#allocation2 + $0x118] sm:$0xff] 0.0
      %87 = vst [vmem:[#allocation2 + $0x120] sm:$0xff] 0.0
      %88 = vst [vmem:[#allocation2 + $0x128] sm:$0xff] 0.0
      %89 = vst [vmem:[#allocation2 + $0x130] sm:$0xff] 0.0
      %90 = vst [vmem:[#allocation2 + $0x138] sm:$0xff] 0.0
      %91 = vst [vmem:[#allocation2 + $0x140] sm:$0xff] 0.0
      %92 = vst [vmem:[#allocation2 + $0x148] sm:$0xff] 0.0
      %93 = vst [vmem:[#allocation2 + $0x150] sm:$0xff] 0.0
      %94 = vst [vmem:[#allocation2 + $0x158] sm:$0xff] 0.0
      %95 = vst [vmem:[#allocation2 + $0x160] sm:$0xff] 0.0
      %96 = vst [vmem:[#allocation2 + $0x168] sm:$0xff] 0.0
      %97 = vst [vmem:[#allocation2 + $0x170] sm:$0xff] 0.0
      %98 = vst [vmem:[#allocation2 + $0x178] sm:$0xff] 0.0
      %99 = vst [vmem:[#allocation2 + $0x180] sm:$0xff] 0.0
      %100 = vst [vmem:[#allocation2 + $0x188] sm:$0xff] 0.0
      %101 = vst [vmem:[#allocation2 + $0x190] sm:$0xff] 0.0
      %102 = vst [vmem:[#allocation2 + $0x198] sm:$0xff] 0.0
      %103 = vst [vmem:[#allocation2 + $0x1a0] sm:$0xff] 0.0
      %104 = vst [vmem:[#allocation2 + $0x1a8] sm:$0xff] 0.0
      %105 = vst [vmem:[#allocation2 + $0x1b0] sm:$0xff] 0.0
      %106 = vst [vmem:[#allocation2 + $0x1b8] sm:$0xff] 0.0
      %107 = vst [vmem:[#allocation2 + $0x1c0] sm:$0xff] 0.0
      %108 = vst [vmem:[#allocation2 + $0x1c8] sm:$0xff] 0.0
      %109 = vst [vmem:[#allocation2 + $0x1d0] sm:$0xff] 0.0
      %110 = vst [vmem:[#allocation2 + $0x1d8] sm:$0xff] 0.0
      %111 = vst [vmem:[#allocation2 + $0x1e0] sm:$0xff] 0.0
      %112 = vst [vmem:[#allocation2 + $0x1e8] sm:$0xff] 0.0
      %113 = vst [vmem:[#allocation2 + $0x1f0] sm:$0xff] 0.0
      %114 = vst [vmem:[#allocation2 + $0x1f8] sm:$0xff] 0.0
    $region29: #{tpu_custom_call.1} parent=1 // pred_fallthru
      _
    %v115 = vld [vmem:[#allocation2] sm:$0xff]
    %v116 = vld [vmem:[#allocation2 + $0x8] sm:$0xff]
    %v117 = vld [vmem:[#allocation2 + $0x10] sm:$0xff]
    %v118 = vld [vmem:[#allocation2 + $0x18] sm:$0xff]
    %v119 = vld [vmem:[#allocation2 + $0x20] sm:$0xff]
    %v120 = vld [vmem:[#allocation2 + $0x28] sm:$0xff]
    %v121 = vld [vmem:[#allocation2 + $0x30] sm:$0xff]
    %v122 = vld [vmem:[#allocation2 + $0x38] sm:$0xff]
    %v123 = vld [vmem:[#allocation2 + $0x40] sm:$0xff]
    %v124 = vld [vmem:[#allocation2 + $0x48] sm:$0xff]
    %v125 = vld [vmem:[#allocation2 + $0x50] sm:$0xff]
    %v126 = vld [vmem:[#allocation2 + $0x58] sm:$0xff]
    %v127 = vld [vmem:[#allocation2 + $0x60] sm:$0xff]
    %v128 = vld [vmem:[#allocation2 + $0x68] sm:$0xff]
    %v129 = vld [vmem:[#allocation2 + $0x70] sm:$0xff]
    %v130 = vld [vmem:[#allocation2 + $0x78] sm:$0xff]
    %v131 = vld [vmem:[#allocation2 + $0x80] sm:$0xff]
    %v132 = vld [vmem:[#allocation2 + $0x88] sm:$0xff]
    %v133 = vld [vmem:[#allocation2 + $0x90] sm:$0xff]
    %v134 = vld [vmem:[#allocation2 + $0x98] sm:$0xff]
    %v135 = vld [vmem:[#allocation2 + $0xa0] sm:$0xff]
    %v136 = vld [vmem:[#allocation2 + $0xa8] sm:$0xff]
    %v137 = vld [vmem:[#allocation2 + $0xb0] sm:$0xff]
    %v138 = vld [vmem:[#allocation2 + $0xb8] sm:$0xff]
    %v139 = vld [vmem:[#allocation2 + $0xc0] sm:$0xff]
    %v140 = vld [vmem:[#allocation2 + $0xc8] sm:$0xff]
    %v141 = vld [vmem:[#allocation2 + $0xd0] sm:$0xff]
    %v142 = vld [vmem:[#allocation2 + $0xd8] sm:$0xff]
    %v143 = vld [vmem:[#allocation2 + $0xe0] sm:$0xff]
    %v144 = vld [vmem:[#allocation2 + $0xe8] sm:$0xff]
    %v145 = vld [vmem:[#allocation2 + $0xf0] sm:$0xff]
    %v146 = vld [vmem:[#allocation2 + $0xf8] sm:$0xff]
    %v147 = vld [vmem:[#allocation2 + $0x100] sm:$0xff]
    %v148 = vld [vmem:[#allocation2 + $0x108] sm:$0xff]
    %v149 = vld [vmem:[#allocation2 + $0x110] sm:$0xff]
    %v150 = vld [vmem:[#allocation2 + $0x118] sm:$0xff]
    %v151 = vld [vmem:[#allocation2 + $0x120] sm:$0xff]
    %v152 = vld [vmem:[#allocation2 + $0x128] sm:$0xff]
    %v153 = vld [vmem:[#allocation2 + $0x130] sm:$0xff]
    %v154 = vld [vmem:[#allocation2 + $0x138] sm:$0xff]
    %v155 = vld [vmem:[#allocation2 + $0x140] sm:$0xff]
    %v156 = vld [vmem:[#allocation2 + $0x148] sm:$0xff]
    %v157 = vld [vmem:[#allocation2 + $0x150] sm:$0xff]
    %v158 = vld [vmem:[#allocation2 + $0x158] sm:$0xff]
    %v159 = vld [vmem:[#allocation2 + $0x160] sm:$0xff]
    %v160 = vld [vmem:[#allocation2 + $0x168] sm:$0xff]
    %v161 = vld [vmem:[#allocation2 + $0x170] sm:$0xff]
    %v162 = vld [vmem:[#allocation2 + $0x178] sm:$0xff]
    %v163 = vld [vmem:[#allocation2 + $0x180] sm:$0xff]
    %v164 = vld [vmem:[#allocation2 + $0x188] sm:$0xff]
    %v165 = vld [vmem:[#allocation2 + $0x190] sm:$0xff]
    %v166 = vld [vmem:[#allocation2 + $0x198] sm:$0xff]
    %v167 = vld [vmem:[#allocation2 + $0x1a0] sm:$0xff]
    %v168 = vld [vmem:[#allocation2 + $0x1a8] sm:$0xff]
    %v169 = vld [vmem:[#allocation2 + $0x1b0] sm:$0xff]
    %v170 = vld [vmem:[#allocation2 + $0x1b8] sm:$0xff]
    %v171 = vld [vmem:[#allocation2 + $0x1c0] sm:$0xff]
    %v172 = vld [vmem:[#allocation2 + $0x1c8] sm:$0xff]
    %v173 = vld [vmem:[#allocation2 + $0x1d0] sm:$0xff]
    %v174 = vld [vmem:[#allocation2 + $0x1d8] sm:$0xff]
    %v175 = vld [vmem:[#allocation2 + $0x1e0] sm:$0xff]
    %v176 = vld [vmem:[#allocation2 + $0x1e8] sm:$0xff]
    %v177 = vld [vmem:[#allocation2 + $0x1f0] sm:$0xff]
    %v178 = vld [vmem:[#allocation2 + $0x1f8] sm:$0xff]
    %v179 = vld [vmem:[#allocation3] sm:$0xff]
    %v180 = vld [vmem:[#allocation3 + $0x8] sm:$0xff]
    %v181 = vld [vmem:[#allocation3 + $0x10] sm:$0xff]
    %v182 = vld [vmem:[#allocation3 + $0x18] sm:$0xff]
    %v183 = vld [vmem:[#allocation3 + $0x20] sm:$0xff]
    %v184 = vld [vmem:[#allocation3 + $0x28] sm:$0xff]
    %v185 = vld [vmem:[#allocation3 + $0x30] sm:$0xff]
    %v186 = vld [vmem:[#allocation3 + $0x38] sm:$0xff]
    %v187 = vld [vmem:[#allocation3 + $0x40] sm:$0xff]
    %v188 = vld [vmem:[#allocation3 + $0x48] sm:$0xff]
    %v189 = vld [vmem:[#allocation3 + $0x50] sm:$0xff]
    %v190 = vld [vmem:[#allocation3 + $0x58] sm:$0xff]
    %v191 = vld [vmem:[#allocation3 + $0x60] sm:$0xff]
    %v192 = vld [vmem:[#allocation3 + $0x68] sm:$0xff]
    %v193 = vld [vmem:[#allocation3 + $0x70] sm:$0xff]
    %v194 = vld [vmem:[#allocation3 + $0x78] sm:$0xff]
    %v195 = vld [vmem:[#allocation3 + $0x80] sm:$0xff]
    %v196 = vld [vmem:[#allocation3 + $0x88] sm:$0xff]
    %v197 = vld [vmem:[#allocation3 + $0x90] sm:$0xff]
    %v198 = vld [vmem:[#allocation3 + $0x98] sm:$0xff]
    %v199 = vld [vmem:[#allocation3 + $0xa0] sm:$0xff]
    %v200 = vld [vmem:[#allocation3 + $0xa8] sm:$0xff]
    %v201 = vld [vmem:[#allocation3 + $0xb0] sm:$0xff]
    %v202 = vld [vmem:[#allocation3 + $0xb8] sm:$0xff]
    %v203 = vld [vmem:[#allocation3 + $0xc0] sm:$0xff]
    %v204 = vld [vmem:[#allocation3 + $0xc8] sm:$0xff]
    %v205 = vld [vmem:[#allocation3 + $0xd0] sm:$0xff]
    %v206 = vld [vmem:[#allocation3 + $0xd8] sm:$0xff]
    %v207 = vld [vmem:[#allocation3 + $0xe0] sm:$0xff]
    %v208 = vld [vmem:[#allocation3 + $0xe8] sm:$0xff]
    %v209 = vld [vmem:[#allocation3 + $0xf0] sm:$0xff]
    %v210 = vld [vmem:[#allocation3 + $0xf8] sm:$0xff]
    %v211 = vld [vmem:[#allocation3 + $0x100] sm:$0xff]
    %v212 = vld [vmem:[#allocation3 + $0x108] sm:$0xff]
    %v213 = vld [vmem:[#allocation3 + $0x110] sm:$0xff]
    %v214 = vld [vmem:[#allocation3 + $0x118] sm:$0xff]
    %v215 = vld [vmem:[#allocation3 + $0x120] sm:$0xff]
    %v216 = vld [vmem:[#allocation3 + $0x128] sm:$0xff]
    %v217 = vld [vmem:[#allocation3 + $0x130] sm:$0xff]
    %v218 = vld [vmem:[#allocation3 + $0x138] sm:$0xff]
    %v219 = vld [vmem:[#allocation3 + $0x140] sm:$0xff]
    %v220 = vld [vmem:[#allocation3 + $0x148] sm:$0xff]
    %v221 = vld [vmem:[#allocation3 + $0x150] sm:$0xff]
    %v222 = vld [vmem:[#allocation3 + $0x158] sm:$0xff]
    %v223 = vld [vmem:[#allocation3 + $0x160] sm:$0xff]
    %v224 = vld [vmem:[#allocation3 + $0x168] sm:$0xff]
    %v225 = vld [vmem:[#allocation3 + $0x170] sm:$0xff]
    %v226 = vld [vmem:[#allocation3 + $0x178] sm:$0xff]
    %v227 = vld [vmem:[#allocation3 + $0x180] sm:$0xff]
    %v228 = vld [vmem:[#allocation3 + $0x188] sm:$0xff]
    %v229 = vld [vmem:[#allocation3 + $0x190] sm:$0xff]
    %v230 = vld [vmem:[#allocation3 + $0x198] sm:$0xff]
    %v231 = vld [vmem:[#allocation3 + $0x1a0] sm:$0xff]
    %v232 = vld [vmem:[#allocation3 + $0x1a8] sm:$0xff]
    %v233 = vld [vmem:[#allocation3 + $0x1b0] sm:$0xff]
    %v234 = vld [vmem:[#allocation3 + $0x1b8] sm:$0xff]
    %v235 = vld [vmem:[#allocation3 + $0x1c0] sm:$0xff]
    %v236 = vld [vmem:[#allocation3 + $0x1c8] sm:$0xff]
    %v237 = vld [vmem:[#allocation3 + $0x1d0] sm:$0xff]
    %v238 = vld [vmem:[#allocation3 + $0x1d8] sm:$0xff]
    %v239 = vld [vmem:[#allocation3 + $0x1e0] sm:$0xff]
    %v240 = vld [vmem:[#allocation3 + $0x1e8] sm:$0xff]
    %v241 = vld [vmem:[#allocation3 + $0x1f0] sm:$0xff]
    %v242 = vld [vmem:[#allocation3 + $0x1f8] sm:$0xff]
    %v243 = vld [vmem:[#allocation6] sm:$0xf]
    %v244 = vld [vmem:[#allocation6 + $0x4] sm:$0xf]
    %v245 = vld [vmem:[#allocation6 + $0x8] sm:$0xf]
    %v246 = vld [vmem:[#allocation6 + $0xc] sm:$0xf]
    %v247 = vld [vmem:[#allocation6 + $0x10] sm:$0xf]
    %v248 = vld [vmem:[#allocation6 + $0x14] sm:$0xf]
    %v249 = vld [vmem:[#allocation6 + $0x18] sm:$0xf]
    %v250 = vld [vmem:[#allocation6 + $0x1c] sm:$0xf]
    %v251 = vld [vmem:[#allocation6 + $0x20] sm:$0xf]
    %v252 = vld [vmem:[#allocation6 + $0x24] sm:$0xf]
    %v253 = vld [vmem:[#allocation6 + $0x28] sm:$0xf]
    %v254 = vld [vmem:[#allocation6 + $0x2c] sm:$0xf]
    %v255 = vld [vmem:[#allocation6 + $0x30] sm:$0xf]
    %v256 = vld [vmem:[#allocation6 + $0x34] sm:$0xf]
    %v257 = vld [vmem:[#allocation6 + $0x38] sm:$0xf]
    %v258 = vld [vmem:[#allocation6 + $0x3c] sm:$0xf]
    %v259 = vld [vmem:[#allocation6 + $0x40] sm:$0xf]
    %v260 = vld [vmem:[#allocation6 + $0x44] sm:$0xf]
    %v261 = vld [vmem:[#allocation6 + $0x48] sm:$0xf]
    %v262 = vld [vmem:[#allocation6 + $0x4c] sm:$0xf]
    %v263 = vld [vmem:[#allocation6 + $0x50] sm:$0xf]
    %v264 = vld [vmem:[#allocation6 + $0x54] sm:$0xf]
    %v265 = vld [vmem:[#allocation6 + $0x58] sm:$0xf]
    %v266 = vld [vmem:[#allocation6 + $0x5c] sm:$0xf]
    %v267 = vld [vmem:[#allocation6 + $0x60] sm:$0xf]
    %v268 = vld [vmem:[#allocation6 + $0x64] sm:$0xf]
    %v269 = vld [vmem:[#allocation6 + $0x68] sm:$0xf]
    %v270 = vld [vmem:[#allocation6 + $0x6c] sm:$0xf]
    %v271 = vld [vmem:[#allocation6 + $0x70] sm:$0xf]
    %v272 = vld [vmem:[#allocation6 + $0x74] sm:$0xf]
    %v273 = vld [vmem:[#allocation6 + $0x78] sm:$0xf]
    %v274 = vld [vmem:[#allocation6 + $0x7c] sm:$0xf]
    %v339 = vunpack.c.l.b16 %v179
    %v340 = vunpack.c.h.b16 %v179
    %v341 = vunpack.c.l.b16 %v180
    %v342 = vunpack.c.h.b16 %v180
    %v343 = vunpack.c.l.b16 %v181
    %v344 = vunpack.c.h.b16 %v181
    %v345 = vunpack.c.l.b16 %v182
    %v346 = vunpack.c.h.b16 %v182
    %v347 = vunpack.c.l.b16 %v183
    %v348 = vunpack.c.h.b16 %v183
    %v349 = vunpack.c.l.b16 %v184
    %v350 = vunpack.c.h.b16 %v184
    %v351 = vunpack.c.l.b16 %v185
    %v352 = vunpack.c.h.b16 %v185
    %v353 = vunpack.c.l.b16 %v186
    %v354 = vunpack.c.h.b16 %v186
    %v355 = vunpack.c.l.b16 %v187
    %v356 = vunpack.c.h.b16 %v187
    %v357 = vunpack.c.l.b16 %v188
    %v358 = vunpack.c.h.b16 %v188
    %v359 = vunpack.c.l.b16 %v189
    %v360 = vunpack.c.h.b16 %v189
    %v361 = vunpack.c.l.b16 %v190
    %v362 = vunpack.c.h.b16 %v190
    %v363 = vunpack.c.l.b16 %v191
    %v364 = vunpack.c.h.b16 %v191
    %v365 = vunpack.c.l.b16 %v192
    %v366 = vunpack.c.h.b16 %v192
    %v367 = vunpack.c.l.b16 %v193
    %v368 = vunpack.c.h.b16 %v193
    %v369 = vunpack.c.l.b16 %v194
    %v370 = vunpack.c.h.b16 %v194
    %v371 = vunpack.c.l.b16 %v195
    %v372 = vunpack.c.h.b16 %v195
    %v373 = vunpack.c.l.b16 %v196
    %v374 = vunpack.c.h.b16 %v196
    %v375 = vunpack.c.l.b16 %v197
    %v376 = vunpack.c.h.b16 %v197
    %v377 = vunpack.c.l.b16 %v198
    %v378 = vunpack.c.h.b16 %v198
    %v379 = vunpack.c.l.b16 %v199
    %v380 = vunpack.c.h.b16 %v199
    %v381 = vunpack.c.l.b16 %v200
    %v382 = vunpack.c.h.b16 %v200
    %v383 = vunpack.c.l.b16 %v201
    %v384 = vunpack.c.h.b16 %v201
    %v385 = vunpack.c.l.b16 %v202
    %v386 = vunpack.c.h.b16 %v202
    %v387 = vunpack.c.l.b16 %v203
    %v388 = vunpack.c.h.b16 %v203
    %v389 = vunpack.c.l.b16 %v204
    %v390 = vunpack.c.h.b16 %v204
    %v391 = vunpack.c.l.b16 %v205
    %v392 = vunpack.c.h.b16 %v205
    %v393 = vunpack.c.l.b16 %v206
    %v394 = vunpack.c.h.b16 %v206
    %v395 = vunpack.c.l.b16 %v207
    %v396 = vunpack.c.h.b16 %v207
    %v397 = vunpack.c.l.b16 %v208
    %v398 = vunpack.c.h.b16 %v208
    %v399 = vunpack.c.l.b16 %v209
    %v400 = vunpack.c.h.b16 %v209
    %v401 = vunpack.c.l.b16 %v210
    %v402 = vunpack.c.h.b16 %v210
    %v403 = vunpack.c.l.b16 %v211
    %v404 = vunpack.c.h.b16 %v211
    %v405 = vunpack.c.l.b16 %v212
    %v406 = vunpack.c.h.b16 %v212
    %v407 = vunpack.c.l.b16 %v213
    %v408 = vunpack.c.h.b16 %v213
    %v409 = vunpack.c.l.b16 %v214
    %v410 = vunpack.c.h.b16 %v214
    %v411 = vunpack.c.l.b16 %v215
    %v412 = vunpack.c.h.b16 %v215
    %v413 = vunpack.c.l.b16 %v216
    %v414 = vunpack.c.h.b16 %v216
    %v415 = vunpack.c.l.b16 %v217
    %v416 = vunpack.c.h.b16 %v217
    %v417 = vunpack.c.l.b16 %v218
    %v418 = vunpack.c.h.b16 %v218
    %v419 = vunpack.c.l.b16 %v219
    %v420 = vunpack.c.h.b16 %v219
    %v421 = vunpack.c.l.b16 %v220
    %v422 = vunpack.c.h.b16 %v220
    %v423 = vunpack.c.l.b16 %v221
    %v424 = vunpack.c.h.b16 %v221
    %v425 = vunpack.c.l.b16 %v222
    %v426 = vunpack.c.h.b16 %v222
    %v427 = vunpack.c.l.b16 %v223
    %v428 = vunpack.c.h.b16 %v223
    %v429 = vunpack.c.l.b16 %v224
    %v430 = vunpack.c.h.b16 %v224
    %v431 = vunpack.c.l.b16 %v225
    %v432 = vunpack.c.h.b16 %v225
    %v433 = vunpack.c.l.b16 %v226
    %v434 = vunpack.c.h.b16 %v226
    %v435 = vunpack.c.l.b16 %v227
    %v436 = vunpack.c.h.b16 %v227
    %v437 = vunpack.c.l.b16 %v228
    %v438 = vunpack.c.h.b16 %v228
    %v439 = vunpack.c.l.b16 %v229
    %v440 = vunpack.c.h.b16 %v229
    %v441 = vunpack.c.l.b16 %v230
    %v442 = vunpack.c.h.b16 %v230
    %v443 = vunpack.c.l.b16 %v231
    %v444 = vunpack.c.h.b16 %v231
    %v445 = vunpack.c.l.b16 %v232
    %v446 = vunpack.c.h.b16 %v232
    %v447 = vunpack.c.l.b16 %v233
    %v448 = vunpack.c.h.b16 %v233
    %v449 = vunpack.c.l.b16 %v234
    %v450 = vunpack.c.h.b16 %v234
    %v451 = vunpack.c.l.b16 %v235
    %v452 = vunpack.c.h.b16 %v235
    %v453 = vunpack.c.l.b16 %v236
    %v454 = vunpack.c.h.b16 %v236
    %v455 = vunpack.c.l.b16 %v237
    %v456 = vunpack.c.h.b16 %v237
    %v457 = vunpack.c.l.b16 %v238
    %v458 = vunpack.c.h.b16 %v238
    %v459 = vunpack.c.l.b16 %v239
    %v460 = vunpack.c.h.b16 %v239
    %v461 = vunpack.c.l.b16 %v240
    %v462 = vunpack.c.h.b16 %v240
    %v463 = vunpack.c.l.b16 %v241
    %v464 = vunpack.c.h.b16 %v241
    %v465 = vunpack.c.l.b16 %v242
    %v466 = vunpack.c.h.b16 %v242
    %v467 = vpack.c.b16 %v341, %v339
    %v468 = vpack.c.b16 %v342, %v340
    %v469 = vpack.c.b16 %v345, %v343
    %v470 = vpack.c.b16 %v346, %v344
    %v471 = vpack.c.b16 %v349, %v347
    %v472 = vpack.c.b16 %v350, %v348
    %v473 = vpack.c.b16 %v353, %v351
    %v474 = vpack.c.b16 %v354, %v352
    %v475 = vpack.c.b16 %v357, %v355
    %v476 = vpack.c.b16 %v358, %v356
    %v477 = vpack.c.b16 %v361, %v359
    %v478 = vpack.c.b16 %v362, %v360
    %v479 = vpack.c.b16 %v365, %v363
    %v480 = vpack.c.b16 %v366, %v364
    %v481 = vpack.c.b16 %v369, %v367
    %v482 = vpack.c.b16 %v370, %v368
    %v483 = vpack.c.b16 %v373, %v371
    %v484 = vpack.c.b16 %v374, %v372
    %v485 = vpack.c.b16 %v377, %v375
    %v486 = vpack.c.b16 %v378, %v376
    %v487 = vpack.c.b16 %v381, %v379
    %v488 = vpack.c.b16 %v382, %v380
    %v489 = vpack.c.b16 %v385, %v383
    %v490 = vpack.c.b16 %v386, %v384
    %v491 = vpack.c.b16 %v389, %v387
    %v492 = vpack.c.b16 %v390, %v388
    %v493 = vpack.c.b16 %v393, %v391
    %v494 = vpack.c.b16 %v394, %v392
    %v495 = vpack.c.b16 %v397, %v395
    %v496 = vpack.c.b16 %v398, %v396
    %v497 = vpack.c.b16 %v401, %v399
    %v498 = vpack.c.b16 %v402, %v400
    %v499 = vpack.c.b16 %v405, %v403
    %v500 = vpack.c.b16 %v406, %v404
    %v501 = vpack.c.b16 %v409, %v407
    %v502 = vpack.c.b16 %v410, %v408
    %v503 = vpack.c.b16 %v413, %v411
    %v504 = vpack.c.b16 %v414, %v412
    %v505 = vpack.c.b16 %v417, %v415
    %v506 = vpack.c.b16 %v418, %v416
    %v507 = vpack.c.b16 %v421, %v419
    %v508 = vpack.c.b16 %v422, %v420
    %v509 = vpack.c.b16 %v425, %v423
    %v510 = vpack.c.b16 %v426, %v424
    %v511 = vpack.c.b16 %v429, %v427
    %v512 = vpack.c.b16 %v430, %v428
    %v513 = vpack.c.b16 %v433, %v431
    %v514 = vpack.c.b16 %v434, %v432
    %v515 = vpack.c.b16 %v437, %v435
    %v516 = vpack.c.b16 %v438, %v436
    %v517 = vpack.c.b16 %v441, %v439
    %v518 = vpack.c.b16 %v442, %v440
    %v519 = vpack.c.b16 %v445, %v443
    %v520 = vpack.c.b16 %v446, %v444
    %v521 = vpack.c.b16 %v449, %v447
    %v522 = vpack.c.b16 %v450, %v448
    %v523 = vpack.c.b16 %v453, %v451
    %v524 = vpack.c.b16 %v454, %v452
    %v525 = vpack.c.b16 %v457, %v455
    %v526 = vpack.c.b16 %v458, %v456
    %v527 = vpack.c.b16 %v461, %v459
    %v528 = vpack.c.b16 %v462, %v460
    %v529 = vpack.c.b16 %v465, %v463
    %v530 = vpack.c.b16 %v466, %v464
    %v627 = vunpack.c.l.b16 %v243
    %v628 = vunpack.c.l.b16 %v244
    %v629 = vunpack.c.l.b16 %v245
    %v630 = vunpack.c.l.b16 %v246
    %v631 = vunpack.c.l.b16 %v247
    %v632 = vunpack.c.l.b16 %v248
    %v633 = vunpack.c.l.b16 %v249
    %v634 = vunpack.c.l.b16 %v250
    %v635 = vunpack.c.l.b16 %v251
    %v636 = vunpack.c.l.b16 %v252
    %v637 = vunpack.c.l.b16 %v253
    %v638 = vunpack.c.l.b16 %v254
    %v639 = vunpack.c.l.b16 %v255
    %v640 = vunpack.c.l.b16 %v256
    %v641 = vunpack.c.l.b16 %v257
    %v642 = vunpack.c.l.b16 %v258
    %v643 = vunpack.c.l.b16 %v259
    %v644 = vunpack.c.l.b16 %v260
    %v645 = vunpack.c.l.b16 %v261
    %v646 = vunpack.c.l.b16 %v262
    %v647 = vunpack.c.l.b16 %v263
    %v648 = vunpack.c.l.b16 %v264
    %v649 = vunpack.c.l.b16 %v265
    %v650 = vunpack.c.l.b16 %v266
    %v651 = vunpack.c.l.b16 %v267
    %v652 = vunpack.c.l.b16 %v268
    %v653 = vunpack.c.l.b16 %v269
    %v654 = vunpack.c.l.b16 %v270
    %v655 = vunpack.c.l.b16 %v271
    %v656 = vunpack.c.l.b16 %v272
    %v657 = vunpack.c.l.b16 %v273
    %v658 = vunpack.c.l.b16 %v274
    %v659 = vpack.c.b16 %v628, %v627
    %v660 = vpack.c.b16 %v630, %v629
    %v661 = vpack.c.b16 %v632, %v631
    %v662 = vpack.c.b16 %v634, %v633
    %v663 = vpack.c.b16 %v636, %v635
    %v664 = vpack.c.b16 %v638, %v637
    %v665 = vpack.c.b16 %v640, %v639
    %v666 = vpack.c.b16 %v642, %v641
    %v667 = vpack.c.b16 %v644, %v643
    %v668 = vpack.c.b16 %v646, %v645
    %v669 = vpack.c.b16 %v648, %v647
    %v670 = vpack.c.b16 %v650, %v649
    %v671 = vpack.c.b16 %v652, %v651
    %v672 = vpack.c.b16 %v654, %v653
    %v673 = vpack.c.b16 %v656, %v655
    %v674 = vpack.c.b16 %v658, %v657
    %691 = vmatprep.subr.bf16.mxu0 0
    %692 = vmatpush1.bf16.msra.mxu0 %v666
    %693 = vmatprep.subr.bf16.mxu0 0
    %694 = vmatpush1.bf16.msra.mxu0 %v665
    %695 = vmatprep.subr.bf16.mxu0 0
    %696 = vmatpush1.bf16.msra.mxu0 %v664
    %697 = vmatprep.subr.bf16.mxu0 0
    %698 = vmatpush1.bf16.msra.mxu0 %v663
    %699 = vmatprep.subr.bf16.mxu0 0
    %700 = vmatpush1.bf16.msra.mxu0 %v662
    %701 = vmatprep.subr.bf16.mxu0 0
    %702 = vmatpush1.bf16.msra.mxu0 %v661
    %703 = vmatprep.subr.bf16.mxu0 0
    %704 = vmatpush1.bf16.msra.mxu0 %v660
    %705 = vmatprep.subr.bf16.mxu0 0
    %706 = vmatpush1.bf16.msra.mxu0 %v659
    %707 = vmatprep.subr.bf16.mxu0 0
    %708 = vmatpush2.bf16.msra.mxu0 %v674
    %709 = vmatprep.subr.bf16.mxu0 0
    %710 = vmatpush2.bf16.msra.mxu0 %v673
    %711 = vmatprep.subr.bf16.mxu0 0
    %712 = vmatpush2.bf16.msra.mxu0 %v672
    %713 = vmatprep.subr.bf16.mxu0 0
    %714 = vmatpush2.bf16.msra.mxu0 %v671
    %715 = vmatprep.subr.bf16.mxu0 0
    %716 = vmatpush2.bf16.msra.mxu0 %v670
    %717 = vmatprep.subr.bf16.mxu0 0
    %718 = vmatpush2.bf16.msra.mxu0 %v669
    %719 = vmatprep.subr.bf16.mxu0 0
    %720 = vmatpush2.bf16.msra.mxu0 %v668
    %721 = vmatprep.subr.bf16.mxu0 0
    %722 = vmatpush2.bf16.msra.mxu0 %v667
    %723 = vmatprep.mubr.bf16.mxu0 %v468
    %724 = vmatmul.mubr.bf16.gmra.mxu0 %v467
    %v725 = vpop.f32.mrf.mxu0
    %v726 = vadd.f32 0.0, %v725
    %v727 = vpop.f32.mrf.mxu0
    %v728 = vpop.f32.mrf.mxu0
    %v729 = vadd.f32 0.0, %v728
    %v730 = vpop.f32.mrf.mxu0
    %731 = vmatprep.mubr.bf16.mxu0 %v470
    %732 = vmatmul.mubr.bf16.gmra.mxu0 %v469
    %v733 = vpop.f32.mrf.mxu0
    %v734 = vadd.f32 0.0, %v733
    %v735 = vpop.f32.mrf.mxu0
    %v736 = vpop.f32.mrf.mxu0
    %v737 = vadd.f32 0.0, %v736
    %v738 = vpop.f32.mrf.mxu0
    %739 = vmatprep.mubr.bf16.mxu0 %v472
    %740 = vmatmul.mubr.bf16.gmra.mxu0 %v471
    %v741 = vpop.f32.mrf.mxu0
    %v742 = vadd.f32 0.0, %v741
    %v743 = vpop.f32.mrf.mxu0
    %v744 = vpop.f32.mrf.mxu0
    %v745 = vadd.f32 0.0, %v744
    %v746 = vpop.f32.mrf.mxu0
    %747 = vmatprep.mubr.bf16.mxu0 %v474
    %748 = vmatmul.mubr.bf16.gmra.mxu0 %v473
    %v749 = vpop.f32.mrf.mxu0
    %v750 = vadd.f32 0.0, %v749
    %v751 = vpop.f32.mrf.mxu0
    %v752 = vpop.f32.mrf.mxu0
    %v753 = vadd.f32 0.0, %v752
    %v754 = vpop.f32.mrf.mxu0
    %755 = vmatprep.mubr.bf16.mxu0 %v476
    %756 = vmatmul.mubr.bf16.gmra.mxu0 %v475
    %v757 = vpop.f32.mrf.mxu0
    %v758 = vadd.f32 0.0, %v757
    %v759 = vpop.f32.mrf.mxu0
    %v760 = vpop.f32.mrf.mxu0
    %v761 = vadd.f32 0.0, %v760
    %v762 = vpop.f32.mrf.mxu0
    %763 = vmatprep.mubr.bf16.mxu0 %v478
    %764 = vmatmul.mubr.bf16.gmra.mxu0 %v477
    %v765 = vpop.f32.mrf.mxu0
    %v766 = vadd.f32 0.0, %v765
    %v767 = vpop.f32.mrf.mxu0
    %v768 = vpop.f32.mrf.mxu0
    %v769 = vadd.f32 0.0, %v768
    %v770 = vpop.f32.mrf.mxu0
    %771 = vmatprep.mubr.bf16.mxu0 %v480
    %772 = vmatmul.mubr.bf16.gmra.mxu0 %v479
    %v773 = vpop.f32.mrf.mxu0
    %v774 = vadd.f32 0.0, %v773
    %v775 = vpop.f32.mrf.mxu0
    %v776 = vpop.f32.mrf.mxu0
    %v777 = vadd.f32 0.0, %v776
    %v778 = vpop.f32.mrf.mxu0
    %779 = vmatprep.mubr.bf16.mxu0 %v482
    %780 = vmatmul.mubr.bf16.gmra.mxu0 %v481
    %v781 = vpop.f32.mrf.mxu0
    %v782 = vadd.f32 0.0, %v781
    %v783 = vpop.f32.mrf.mxu0
    %v784 = vpop.f32.mrf.mxu0
    %v785 = vadd.f32 0.0, %v784
    %v786 = vpop.f32.mrf.mxu0
    %787 = vmatprep.mubr.bf16.mxu0 %v484
    %788 = vmatmul.mubr.bf16.gmra.mxu0 %v483
    %v789 = vpop.f32.mrf.mxu0
    %v790 = vadd.f32 0.0, %v789
    %v791 = vpop.f32.mrf.mxu0
    %v792 = vpop.f32.mrf.mxu0
    %v793 = vadd.f32 0.0, %v792
    %v794 = vpop.f32.mrf.mxu0
    %795 = vmatprep.mubr.bf16.mxu0 %v486
    %796 = vmatmul.mubr.bf16.gmra.mxu0 %v485
    %v797 = vpop.f32.mrf.mxu0
    %v798 = vadd.f32 0.0, %v797
    %v799 = vpop.f32.mrf.mxu0
    %v800 = vpop.f32.mrf.mxu0
    %v801 = vadd.f32 0.0, %v800
    %v802 = vpop.f32.mrf.mxu0
    %803 = vmatprep.mubr.bf16.mxu0 %v488
    %804 = vmatmul.mubr.bf16.gmra.mxu0 %v487
    %v805 = vpop.f32.mrf.mxu0
    %v806 = vadd.f32 0.0, %v805
    %v807 = vpop.f32.mrf.mxu0
    %v808 = vpop.f32.mrf.mxu0
    %v809 = vadd.f32 0.0, %v808
    %v810 = vpop.f32.mrf.mxu0
    %811 = vmatprep.mubr.bf16.mxu0 %v490
    %812 = vmatmul.mubr.bf16.gmra.mxu0 %v489
    %v813 = vpop.f32.mrf.mxu0
    %v814 = vadd.f32 0.0, %v813
    %v815 = vpop.f32.mrf.mxu0
    %v816 = vpop.f32.mrf.mxu0
    %v817 = vadd.f32 0.0, %v816
    %v818 = vpop.f32.mrf.mxu0
    %819 = vmatprep.mubr.bf16.mxu0 %v492
    %820 = vmatmul.mubr.bf16.gmra.mxu0 %v491
    %v821 = vpop.f32.mrf.mxu0
    %v822 = vadd.f32 0.0, %v821
    %v823 = vpop.f32.mrf.mxu0
    %v824 = vpop.f32.mrf.mxu0
    %v825 = vadd.f32 0.0, %v824
    %v826 = vpop.f32.mrf.mxu0
    %827 = vmatprep.mubr.bf16.mxu0 %v494
    %828 = vmatmul.mubr.bf16.gmra.mxu0 %v493
    %v829 = vpop.f32.mrf.mxu0
    %v830 = vadd.f32 0.0, %v829
    %v831 = vpop.f32.mrf.mxu0
    %v832 = vpop.f32.mrf.mxu0
    %v833 = vadd.f32 0.0, %v832
    %v834 = vpop.f32.mrf.mxu0
    %835 = vmatprep.mubr.bf16.mxu0 %v496
    %836 = vmatmul.mubr.bf16.gmra.mxu0 %v495
    %v837 = vpop.f32.mrf.mxu0
    %v838 = vadd.f32 0.0, %v837
    %v839 = vpop.f32.mrf.mxu0
    %v840 = vpop.f32.mrf.mxu0
    %v841 = vadd.f32 0.0, %v840
    %v842 = vpop.f32.mrf.mxu0
    %843 = vmatprep.mubr.bf16.mxu0 %v498
    %844 = vmatmul.mubr.bf16.gmra.mxu0 %v497
    %v845 = vpop.f32.mrf.mxu0
    %v846 = vadd.f32 0.0, %v845
    %v847 = vpop.f32.mrf.mxu0
    %v848 = vpop.f32.mrf.mxu0
    %v849 = vadd.f32 0.0, %v848
    %v850 = vpop.f32.mrf.mxu0
    %851 = vmatprep.mubr.bf16.mxu0 %v500
    %852 = vmatmul.mubr.bf16.gmra.mxu0 %v499
    %v853 = vpop.f32.mrf.mxu0
    %v854 = vadd.f32 0.0, %v853
    %v855 = vpop.f32.mrf.mxu0
    %v856 = vpop.f32.mrf.mxu0
    %v857 = vadd.f32 0.0, %v856
    %v858 = vpop.f32.mrf.mxu0
    %859 = vmatprep.mubr.bf16.mxu0 %v502
    %860 = vmatmul.mubr.bf16.gmra.mxu0 %v501
    %v861 = vpop.f32.mrf.mxu0
    %v862 = vadd.f32 0.0, %v861
    %v863 = vpop.f32.mrf.mxu0
    %v864 = vpop.f32.mrf.mxu0
    %v865 = vadd.f32 0.0, %v864
    %v866 = vpop.f32.mrf.mxu0
    %867 = vmatprep.mubr.bf16.mxu0 %v504
    %868 = vmatmul.mubr.bf16.gmra.mxu0 %v503
    %v869 = vpop.f32.mrf.mxu0
    %v870 = vadd.f32 0.0, %v869
    %v871 = vpop.f32.mrf.mxu0
    %v872 = vpop.f32.mrf.mxu0
    %v873 = vadd.f32 0.0, %v872
    %v874 = vpop.f32.mrf.mxu0
    %875 = vmatprep.mubr.bf16.mxu0 %v506
    %876 = vmatmul.mubr.bf16.gmra.mxu0 %v505
    %v877 = vpop.f32.mrf.mxu0
    %v878 = vadd.f32 0.0, %v877
    %v879 = vpop.f32.mrf.mxu0
    %v880 = vpop.f32.mrf.mxu0
    %v881 = vadd.f32 0.0, %v880
    %v882 = vpop.f32.mrf.mxu0
    %883 = vmatprep.mubr.bf16.mxu0 %v508
    %884 = vmatmul.mubr.bf16.gmra.mxu0 %v507
    %v885 = vpop.f32.mrf.mxu0
    %v886 = vadd.f32 0.0, %v885
    %v887 = vpop.f32.mrf.mxu0
    %v888 = vpop.f32.mrf.mxu0
    %v889 = vadd.f32 0.0, %v888
    %v890 = vpop.f32.mrf.mxu0
    %891 = vmatprep.mubr.bf16.mxu0 %v510
    %892 = vmatmul.mubr.bf16.gmra.mxu0 %v509
    %v893 = vpop.f32.mrf.mxu0
    %v894 = vadd.f32 0.0, %v893
    %v895 = vpop.f32.mrf.mxu0
    %v896 = vpop.f32.mrf.mxu0
    %v897 = vadd.f32 0.0, %v896
    %v898 = vpop.f32.mrf.mxu0
    %899 = vmatprep.mubr.bf16.mxu0 %v512
    %900 = vmatmul.mubr.bf16.gmra.mxu0 %v511
    %v901 = vpop.f32.mrf.mxu0
    %v902 = vadd.f32 0.0, %v901
    %v903 = vpop.f32.mrf.mxu0
    %v904 = vpop.f32.mrf.mxu0
    %v905 = vadd.f32 0.0, %v904
    %v906 = vpop.f32.mrf.mxu0
    %907 = vmatprep.mubr.bf16.mxu0 %v514
    %908 = vmatmul.mubr.bf16.gmra.mxu0 %v513
    %v909 = vpop.f32.mrf.mxu0
    %v910 = vadd.f32 0.0, %v909
    %v911 = vpop.f32.mrf.mxu0
    %v912 = vpop.f32.mrf.mxu0
    %v913 = vadd.f32 0.0, %v912
    %v914 = vpop.f32.mrf.mxu0
    %915 = vmatprep.mubr.bf16.mxu0 %v516
    %916 = vmatmul.mubr.bf16.gmra.mxu0 %v515
    %v917 = vpop.f32.mrf.mxu0
    %v918 = vadd.f32 0.0, %v917
    %v919 = vpop.f32.mrf.mxu0
    %v920 = vpop.f32.mrf.mxu0
    %v921 = vadd.f32 0.0, %v920
    %v922 = vpop.f32.mrf.mxu0
    %923 = vmatprep.mubr.bf16.mxu0 %v518
    %924 = vmatmul.mubr.bf16.gmra.mxu0 %v517
    %v925 = vpop.f32.mrf.mxu0
    %v926 = vadd.f32 0.0, %v925
    %v927 = vpop.f32.mrf.mxu0
    %v928 = vpop.f32.mrf.mxu0
    %v929 = vadd.f32 0.0, %v928
    %v930 = vpop.f32.mrf.mxu0
    %931 = vmatprep.mubr.bf16.mxu0 %v520
    %932 = vmatmul.mubr.bf16.gmra.mxu0 %v519
    %v933 = vpop.f32.mrf.mxu0
    %v934 = vadd.f32 0.0, %v933
    %v935 = vpop.f32.mrf.mxu0
    %v936 = vpop.f32.mrf.mxu0
    %v937 = vadd.f32 0.0, %v936
    %v938 = vpop.f32.mrf.mxu0
    %939 = vmatprep.mubr.bf16.mxu0 %v522
    %940 = vmatmul.mubr.bf16.gmra.mxu0 %v521
    %v941 = vpop.f32.mrf.mxu0
    %v942 = vadd.f32 0.0, %v941
    %v943 = vpop.f32.mrf.mxu0
    %v944 = vpop.f32.mrf.mxu0
    %v945 = vadd.f32 0.0, %v944
    %v946 = vpop.f32.mrf.mxu0
    %947 = vmatprep.mubr.bf16.mxu0 %v524
    %948 = vmatmul.mubr.bf16.gmra.mxu0 %v523
    %v949 = vpop.f32.mrf.mxu0
    %v950 = vadd.f32 0.0, %v949
    %v951 = vpop.f32.mrf.mxu0
    %v952 = vpop.f32.mrf.mxu0
    %v953 = vadd.f32 0.0, %v952
    %v954 = vpop.f32.mrf.mxu0
    %955 = vmatprep.mubr.bf16.mxu0 %v526
    %956 = vmatmul.mubr.bf16.gmra.mxu0 %v525
    %v957 = vpop.f32.mrf.mxu0
    %v958 = vadd.f32 0.0, %v957
    %v959 = vpop.f32.mrf.mxu0
    %v960 = vpop.f32.mrf.mxu0
    %v961 = vadd.f32 0.0, %v960
    %v962 = vpop.f32.mrf.mxu0
    %963 = vmatprep.mubr.bf16.mxu0 %v528
    %964 = vmatmul.mubr.bf16.gmra.mxu0 %v527
    %v965 = vpop.f32.mrf.mxu0
    %v966 = vadd.f32 0.0, %v965
    %v967 = vpop.f32.mrf.mxu0
    %v968 = vpop.f32.mrf.mxu0
    %v969 = vadd.f32 0.0, %v968
    %v970 = vpop.f32.mrf.mxu0
    %971 = vmatprep.mubr.bf16.mxu0 %v530
    %972 = vmatmul.mubr.bf16.gmra.mxu0 %v529
    %v973 = vpop.f32.mrf.mxu0
    %v974 = vadd.f32 0.0, %v973
    %v975 = vpop.f32.mrf.mxu0
    %v976 = vpop.f32.mrf.mxu0
    %v977 = vadd.f32 0.0, %v976
    %v978 = vpop.f32.mrf.mxu0
    %979 = vdwg.mxu0
    %v980 = vadd.f32 %v115, %v726
    %v981 = vadd.f32 %v116, %v729
    %v982 = vadd.f32 %v117, %v734
    %v983 = vadd.f32 %v118, %v737
    %v984 = vadd.f32 %v119, %v742
    %v985 = vadd.f32 %v120, %v745
    %v986 = vadd.f32 %v121, %v750
    %v987 = vadd.f32 %v122, %v753
    %v988 = vadd.f32 %v123, %v758
    %v989 = vadd.f32 %v124, %v761
    %v990 = vadd.f32 %v125, %v766
    %v991 = vadd.f32 %v126, %v769
    %v992 = vadd.f32 %v127, %v774
    %v993 = vadd.f32 %v128, %v777
    %v994 = vadd.f32 %v129, %v782
    %v995 = vadd.f32 %v130, %v785
    %v996 = vadd.f32 %v131, %v790
    %v997 = vadd.f32 %v132, %v793
    %v998 = vadd.f32 %v133, %v798
    %v999 = vadd.f32 %v134, %v801
    %v1000 = vadd.f32 %v135, %v806
    %v1001 = vadd.f32 %v136, %v809
    %v1002 = vadd.f32 %v137, %v814
    %v1003 = vadd.f32 %v138, %v817
    %v1004 = vadd.f32 %v139, %v822
    %v1005 = vadd.f32 %v140, %v825
    %v1006 = vadd.f32 %v141, %v830
    %v1007 = vadd.f32 %v142, %v833
    %v1008 = vadd.f32 %v143, %v838
    %v1009 = vadd.f32 %v144, %v841
    %v1010 = vadd.f32 %v145, %v846
    %v1011 = vadd.f32 %v146, %v849
    %v1012 = vadd.f32 %v147, %v854
    %v1013 = vadd.f32 %v148, %v857
    %v1014 = vadd.f32 %v149, %v862
    %v1015 = vadd.f32 %v150, %v865
    %v1016 = vadd.f32 %v151, %v870
    %v1017 = vadd.f32 %v152, %v873
    %v1018 = vadd.f32 %v153, %v878
    %v1019 = vadd.f32 %v154, %v881
    %v1020 = vadd.f32 %v155, %v886
    %v1021 = vadd.f32 %v156, %v889
    %v1022 = vadd.f32 %v157, %v894
    %v1023 = vadd.f32 %v158, %v897
    %v1024 = vadd.f32 %v159, %v902
    %v1025 = vadd.f32 %v160, %v905
    %v1026 = vadd.f32 %v161, %v910
    %v1027 = vadd.f32 %v162, %v913
    %v1028 = vadd.f32 %v163, %v918
    %v1029 = vadd.f32 %v164, %v921
    %v1030 = vadd.f32 %v165, %v926
    %v1031 = vadd.f32 %v166, %v929
    %v1032 = vadd.f32 %v167, %v934
    %v1033 = vadd.f32 %v168, %v937
    %v1034 = vadd.f32 %v169, %v942
    %v1035 = vadd.f32 %v170, %v945
    %v1036 = vadd.f32 %v171, %v950
    %v1037 = vadd.f32 %v172, %v953
    %v1038 = vadd.f32 %v173, %v958
    %v1039 = vadd.f32 %v174, %v961
    %v1040 = vadd.f32 %v175, %v966
    %v1041 = vadd.f32 %v176, %v969
    %v1042 = vadd.f32 %v177, %v974
    %v1043 = vadd.f32 %v178, %v977
    %1044 = vst [vmem:[#allocation2] sm:$0xff] %v980
    %1045 = vst [vmem:[#allocation2 + $0x8] sm:$0xff] %v981
    %1046 = vst [vmem:[#allocation2 + $0x10] sm:$0xff] %v982
    %1047 = vst [vmem:[#allocation2 + $0x18] sm:$0xff] %v983
    %1048 = vst [vmem:[#allocation2 + $0x20] sm:$0xff] %v984
    %1049 = vst [vmem:[#allocation2 + $0x28] sm:$0xff] %v985
    %1050 = vst [vmem:[#allocation2 + $0x30] sm:$0xff] %v986
    %1051 = vst [vmem:[#allocation2 + $0x38] sm:$0xff] %v987
    %1052 = vst [vmem:[#allocation2 + $0x40] sm:$0xff] %v988
    %1053 = vst [vmem:[#allocation2 + $0x48] sm:$0xff] %v989
    %1054 = vst [vmem:[#allocation2 + $0x50] sm:$0xff] %v990
    %1055 = vst [vmem:[#allocation2 + $0x58] sm:$0xff] %v991
    %1056 = vst [vmem:[#allocation2 + $0x60] sm:$0xff] %v992
    %1057 = vst [vmem:[#allocation2 + $0x68] sm:$0xff] %v993
    %1058 = vst [vmem:[#allocation2 + $0x70] sm:$0xff] %v994
    %1059 = vst [vmem:[#allocation2 + $0x78] sm:$0xff] %v995
    %1060 = vst [vmem:[#allocation2 + $0x80] sm:$0xff] %v996
    %1061 = vst [vmem:[#allocation2 + $0x88] sm:$0xff] %v997
    %1062 = vst [vmem:[#allocation2 + $0x90] sm:$0xff] %v998
    %1063 = vst [vmem:[#allocation2 + $0x98] sm:$0xff] %v999
    %1064 = vst [vmem:[#allocation2 + $0xa0] sm:$0xff] %v1000
    %1065 = vst [vmem:[#allocation2 + $0xa8] sm:$0xff] %v1001
    %1066 = vst [vmem:[#allocation2 + $0xb0] sm:$0xff] %v1002
    %1067 = vst [vmem:[#allocation2 + $0xb8] sm:$0xff] %v1003
    %1068 = vst [vmem:[#allocation2 + $0xc0] sm:$0xff] %v1004
    %1069 = vst [vmem:[#allocation2 + $0xc8] sm:$0xff] %v1005
    %1070 = vst [vmem:[#allocation2 + $0xd0] sm:$0xff] %v1006
    %1071 = vst [vmem:[#allocation2 + $0xd8] sm:$0xff] %v1007
    %1072 = vst [vmem:[#allocation2 + $0xe0] sm:$0xff] %v1008
    %1073 = vst [vmem:[#allocation2 + $0xe8] sm:$0xff] %v1009
    %1074 = vst [vmem:[#allocation2 + $0xf0] sm:$0xff] %v1010
    %1075 = vst [vmem:[#allocation2 + $0xf8] sm:$0xff] %v1011
    %1076 = vst [vmem:[#allocation2 + $0x100] sm:$0xff] %v1012
    %1077 = vst [vmem:[#allocation2 + $0x108] sm:$0xff] %v1013
    %1078 = vst [vmem:[#allocation2 + $0x110] sm:$0xff] %v1014
    %1079 = vst [vmem:[#allocation2 + $0x118] sm:$0xff] %v1015
    %1080 = vst [vmem:[#allocation2 + $0x120] sm:$0xff] %v1016
    %1081 = vst [vmem:[#allocation2 + $0x128] sm:$0xff] %v1017
    %1082 = vst [vmem:[#allocation2 + $0x130] sm:$0xff] %v1018
    %1083 = vst [vmem:[#allocation2 + $0x138] sm:$0xff] %v1019
    %1084 = vst [vmem:[#allocation2 + $0x140] sm:$0xff] %v1020
    %1085 = vst [vmem:[#allocation2 + $0x148] sm:$0xff] %v1021
    %1086 = vst [vmem:[#allocation2 + $0x150] sm:$0xff] %v1022
    %1087 = vst [vmem:[#allocation2 + $0x158] sm:$0xff] %v1023
    %1088 = vst [vmem:[#allocation2 + $0x160] sm:$0xff] %v1024
    %1089 = vst [vmem:[#allocation2 + $0x168] sm:$0xff] %v1025
    %1090 = vst [vmem:[#allocation2 + $0x170] sm:$0xff] %v1026
    %1091 = vst [vmem:[#allocation2 + $0x178] sm:$0xff] %v1027
    %1092 = vst [vmem:[#allocation2 + $0x180] sm:$0xff] %v1028
    %1093 = vst [vmem:[#allocation2 + $0x188] sm:$0xff] %v1029
    %1094 = vst [vmem:[#allocation2 + $0x190] sm:$0xff] %v1030
    %1095 = vst [vmem:[#allocation2 + $0x198] sm:$0xff] %v1031
    %1096 = vst [vmem:[#allocation2 + $0x1a0] sm:$0xff] %v1032
    %1097 = vst [vmem:[#allocation2 + $0x1a8] sm:$0xff] %v1033
    %1098 = vst [vmem:[#allocation2 + $0x1b0] sm:$0xff] %v1034
    %1099 = vst [vmem:[#allocation2 + $0x1b8] sm:$0xff] %v1035
    %1100 = vst [vmem:[#allocation2 + $0x1c0] sm:$0xff] %v1036
    %1101 = vst [vmem:[#allocation2 + $0x1c8] sm:$0xff] %v1037
    %1102 = vst [vmem:[#allocation2 + $0x1d0] sm:$0xff] %v1038
    %1103 = vst [vmem:[#allocation2 + $0x1d8] sm:$0xff] %v1039
    %1104 = vst [vmem:[#allocation2 + $0x1e0] sm:$0xff] %v1040
    %1105 = vst [vmem:[#allocation2 + $0x1e8] sm:$0xff] %v1041
    %1106 = vst [vmem:[#allocation2 + $0x1f0] sm:$0xff] %v1042
    %1107 = vst [vmem:[#allocation2 + $0x1f8] sm:$0xff] %v1043
    // Predicated region
    $region30: #{tpu_custom_call.1} parent=1 // pred_check
      %p1108 = pneg %p47
    $region31: #{tpu_custom_call.1} parent=1 // pred_check_branch
      %1110 = sbr.rel (%p1108) target = $region33
    $region32: #{tpu_custom_call.1} parent=1 // pred_region
      %v1111 = vld [vmem:[#allocation2] sm:$0xff]
      %v1112 = vld [vmem:[#allocation2 + $0x8] sm:$0xff]
      %v1113 = vld [vmem:[#allocation2 + $0x10] sm:$0xff]
      %v1114 = vld [vmem:[#allocation2 + $0x18] sm:$0xff]
      %v1115 = vld [vmem:[#allocation2 + $0x20] sm:$0xff]
      %v1116 = vld [vmem:[#allocation2 + $0x28] sm:$0xff]
      %v1117 = vld [vmem:[#allocation2 + $0x30] sm:$0xff]
      %v1118 = vld [vmem:[#allocation2 + $0x38] sm:$0xff]
      %v1119 = vld [vmem:[#allocation2 + $0x40] sm:$0xff]
      %v1120 = vld [vmem:[#allocation2 + $0x48] sm:$0xff]
      %v1121 = vld [vmem:[#allocation2 + $0x50] sm:$0xff]
      %v1122 = vld [vmem:[#allocation2 + $0x58] sm:$0xff]
      %v1123 = vld [vmem:[#allocation2 + $0x60] sm:$0xff]
      %v1124 = vld [vmem:[#allocation2 + $0x68] sm:$0xff]
      %v1125 = vld [vmem:[#allocation2 + $0x70] sm:$0xff]
      %v1126 = vld [vmem:[#allocation2 + $0x78] sm:$0xff]
      %v1127 = vld [vmem:[#allocation2 + $0x80] sm:$0xff]
      %v1128 = vld [vmem:[#allocation2 + $0x88] sm:$0xff]
      %v1129 = vld [vmem:[#allocation2 + $0x90] sm:$0xff]
      %v1130 = vld [vmem:[#allocation2 + $0x98] sm:$0xff]
      %v1131 = vld [vmem:[#allocation2 + $0xa0] sm:$0xff]
      %v1132 = vld [vmem:[#allocation2 + $0xa8] sm:$0xff]
      %v1133 = vld [vmem:[#allocation2 + $0xb0] sm:$0xff]
      %v1134 = vld [vmem:[#allocation2 + $0xb8] sm:$0xff]
      %v1135 = vld [vmem:[#allocation2 + $0xc0] sm:$0xff]
      %v1136 = vld [vmem:[#allocation2 + $0xc8] sm:$0xff]
      %v1137 = vld [vmem:[#allocation2 + $0xd0] sm:$0xff]
      %v1138 = vld [vmem:[#allocation2 + $0xd8] sm:$0xff]
      %v1139 = vld [vmem:[#allocation2 + $0xe0] sm:$0xff]
      %v1140 = vld [vmem:[#allocation2 + $0xe8] sm:$0xff]
      %v1141 = vld [vmem:[#allocation2 + $0xf0] sm:$0xff]
      %v1142 = vld [vmem:[#allocation2 + $0xf8] sm:$0xff]
      %v1143 = vld [vmem:[#allocation2 + $0x100] sm:$0xff]
      %v1144 = vld [vmem:[#allocation2 + $0x108] sm:$0xff]
      %v1145 = vld [vmem:[#allocation2 + $0x110] sm:$0xff]
      %v1146 = vld [vmem:[#allocation2 + $0x118] sm:$0xff]
      %v1147 = vld [vmem:[#allocation2 + $0x120] sm:$0xff]
      %v1148 = vld [vmem:[#allocation2 + $0x128] sm:$0xff]
      %v1149 = vld [vmem:[#allocation2 + $0x130] sm:$0xff]
      %v1150 = vld [vmem:[#allocation2 + $0x138] sm:$0xff]
      %v1151 = vld [vmem:[#allocation2 + $0x140] sm:$0xff]
      %v1152 = vld [vmem:[#allocation2 + $0x148] sm:$0xff]
      %v1153 = vld [vmem:[#allocation2 + $0x150] sm:$0xff]
      %v1154 = vld [vmem:[#allocation2 + $0x158] sm:$0xff]
      %v1155 = vld [vmem:[#allocation2 + $0x160] sm:$0xff]
      %v1156 = vld [vmem:[#allocation2 + $0x168] sm:$0xff]
      %v1157 = vld [vmem:[#allocation2 + $0x170] sm:$0xff]
      %v1158 = vld [vmem:[#allocation2 + $0x178] sm:$0xff]
      %v1159 = vld [vmem:[#allocation2 + $0x180] sm:$0xff]
      %v1160 = vld [vmem:[#allocation2 + $0x188] sm:$0xff]
      %v1161 = vld [vmem:[#allocation2 + $0x190] sm:$0xff]
      %v1162 = vld [vmem:[#allocation2 + $0x198] sm:$0xff]
      %v1163 = vld [vmem:[#allocation2 + $0x1a0] sm:$0xff]
      %v1164 = vld [vmem:[#allocation2 + $0x1a8] sm:$0xff]
      %v1165 = vld [vmem:[#allocation2 + $0x1b0] sm:$0xff]
      %v1166 = vld [vmem:[#allocation2 + $0x1b8] sm:$0xff]
      %v1167 = vld [vmem:[#allocation2 + $0x1c0] sm:$0xff]
      %v1168 = vld [vmem:[#allocation2 + $0x1c8] sm:$0xff]
      %v1169 = vld [vmem:[#allocation2 + $0x1d0] sm:$0xff]
      %v1170 = vld [vmem:[#allocation2 + $0x1d8] sm:$0xff]
      %v1171 = vld [vmem:[#allocation2 + $0x1e0] sm:$0xff]
      %v1172 = vld [vmem:[#allocation2 + $0x1e8] sm:$0xff]
      %v1173 = vld [vmem:[#allocation2 + $0x1f0] sm:$0xff]
      %v1174 = vld [vmem:[#allocation2 + $0x1f8] sm:$0xff]
      %v1175 = vld [vmem:[%s2] sm:$0x1]
      %v1177 = vlaneseq
      %v1178 = vshrl.u32 %v1177, 7
      %v1179 = vsub.s32 0, %v1178
      %v1180 = vrot.slane %v1175, %v1179
      %v1182 = vmul.f32 %v1111, %v1180
      %v1183 = vmul.f32 %v1112, %v1180
      %v1184 = vmul.f32 %v1113, %v1180
      %v1185 = vmul.f32 %v1114, %v1180
      %v1186 = vmul.f32 %v1115, %v1180
      %v1187 = vmul.f32 %v1116, %v1180
      %v1188 = vmul.f32 %v1117, %v1180
      %v1189 = vmul.f32 %v1118, %v1180
      %v1190 = vmul.f32 %v1119, %v1180
      %v1191 = vmul.f32 %v1120, %v1180
      %v1192 = vmul.f32 %v1121, %v1180
      %v1193 = vmul.f32 %v1122, %v1180
      %v1194 = vmul.f32 %v1123, %v1180
      %v1195 = vmul.f32 %v1124, %v1180
      %v1196 = vmul.f32 %v1125, %v1180
      %v1197 = vmul.f32 %v1126, %v1180
      %v1198 = vmul.f32 %v1127, %v1180
      %v1199 = vmul.f32 %v1128, %v1180
      %v1200 = vmul.f32 %v1129, %v1180
      %v1201 = vmul.f32 %v1130, %v1180
      %v1202 = vmul.f32 %v1131, %v1180
      %v1203 = vmul.f32 %v1132, %v1180
      %v1204 = vmul.f32 %v1133, %v1180
      %v1205 = vmul.f32 %v1134, %v1180
      %v1206 = vmul.f32 %v1135, %v1180
      %v1207 = vmul.f32 %v1136, %v1180
      %v1208 = vmul.f32 %v1137, %v1180
      %v1209 = vmul.f32 %v1138, %v1180
      %v1210 = vmul.f32 %v1139, %v1180
      %v1211 = vmul.f32 %v1140, %v1180
      %v1212 = vmul.f32 %v1141, %v1180
      %v1213 = vmul.f32 %v1142, %v1180
      %v1214 = vmul.f32 %v1143, %v1180
      %v1215 = vmul.f32 %v1144, %v1180
      %v1216 = vmul.f32 %v1145, %v1180
      %v1217 = vmul.f32 %v1146, %v1180
      %v1218 = vmul.f32 %v1147, %v1180
      %v1219 = vmul.f32 %v1148, %v1180
      %v1220 = vmul.f32 %v1149, %v1180
      %v1221 = vmul.f32 %v1150, %v1180
      %v1222 = vmul.f32 %v1151, %v1180
      %v1223 = vmul.f32 %v1152, %v1180
      %v1224 = vmul.f32 %v1153, %v1180
      %v1225 = vmul.f32 %v1154, %v1180
      %v1226 = vmul.f32 %v1155, %v1180
      %v1227 = vmul.f32 %v1156, %v1180
      %v1228 = vmul.f32 %v1157, %v1180
      %v1229 = vmul.f32 %v1158, %v1180
      %v1230 = vmul.f32 %v1159, %v1180
      %v1231 = vmul.f32 %v1160, %v1180
      %v1232 = vmul.f32 %v1161, %v1180
      %v1233 = vmul.f32 %v1162, %v1180
      %v1234 = vmul.f32 %v1163, %v1180
      %v1235 = vmul.f32 %v1164, %v1180
      %v1236 = vmul.f32 %v1165, %v1180
      %v1237 = vmul.f32 %v1166, %v1180
      %v1238 = vmul.f32 %v1167, %v1180
      %v1239 = vmul.f32 %v1168, %v1180
      %v1240 = vmul.f32 %v1169, %v1180
      %v1241 = vmul.f32 %v1170, %v1180
      %v1242 = vmul.f32 %v1171, %v1180
      %v1243 = vmul.f32 %v1172, %v1180
      %v1244 = vmul.f32 %v1173, %v1180
      %v1245 = vmul.f32 %v1174, %v1180
      %v1246 = vld [vmem:[%s3] sm:$0x1]
      %v1248 = vlaneseq
      %v1249 = vshrl.u32 %v1248, 7
      %v1250 = vsub.s32 0, %v1249
      %v1251 = vrot.slane %v1246, %v1250
      %v1253 = vadd.f32 %v1182, %v1251
      %v1254 = vadd.f32 %v1183, %v1251
      %v1255 = vadd.f32 %v1184, %v1251
      %v1256 = vadd.f32 %v1185, %v1251
      %v1257 = vadd.f32 %v1186, %v1251
      %v1258 = vadd.f32 %v1187, %v1251
      %v1259 = vadd.f32 %v1188, %v1251
      %v1260 = vadd.f32 %v1189, %v1251
      %v1261 = vadd.f32 %v1190, %v1251
      %v1262 = vadd.f32 %v1191, %v1251
      %v1263 = vadd.f32 %v1192, %v1251
      %v1264 = vadd.f32 %v1193, %v1251
      %v1265 = vadd.f32 %v1194, %v1251
      %v1266 = vadd.f32 %v1195, %v1251
      %v1267 = vadd.f32 %v1196, %v1251
      %v1268 = vadd.f32 %v1197, %v1251
      %v1269 = vadd.f32 %v1198, %v1251
      %v1270 = vadd.f32 %v1199, %v1251
      %v1271 = vadd.f32 %v1200, %v1251
      %v1272 = vadd.f32 %v1201, %v1251
      %v1273 = vadd.f32 %v1202, %v1251
      %v1274 = vadd.f32 %v1203, %v1251
      %v1275 = vadd.f32 %v1204, %v1251
      %v1276 = vadd.f32 %v1205, %v1251
      %v1277 = vadd.f32 %v1206, %v1251
      %v1278 = vadd.f32 %v1207, %v1251
      %v1279 = vadd.f32 %v1208, %v1251
      %v1280 = vadd.f32 %v1209, %v1251
      %v1281 = vadd.f32 %v1210, %v1251
      %v1282 = vadd.f32 %v1211, %v1251
      %v1283 = vadd.f32 %v1212, %v1251
      %v1284 = vadd.f32 %v1213, %v1251
      %v1285 = vadd.f32 %v1214, %v1251
      %v1286 = vadd.f32 %v1215, %v1251
      %v1287 = vadd.f32 %v1216, %v1251
      %v1288 = vadd.f32 %v1217, %v1251
      %v1289 = vadd.f32 %v1218, %v1251
      %v1290 = vadd.f32 %v1219, %v1251
      %v1291 = vadd.f32 %v1220, %v1251
      %v1292 = vadd.f32 %v1221, %v1251
      %v1293 = vadd.f32 %v1222, %v1251
      %v1294 = vadd.f32 %v1223, %v1251
      %v1295 = vadd.f32 %v1224, %v1251
      %v1296 = vadd.f32 %v1225, %v1251
      %v1297 = vadd.f32 %v1226, %v1251
      %v1298 = vadd.f32 %v1227, %v1251
      %v1299 = vadd.f32 %v1228, %v1251
      %v1300 = vadd.f32 %v1229, %v1251
      %v1301 = vadd.f32 %v1230, %v1251
      %v1302 = vadd.f32 %v1231, %v1251
      %v1303 = vadd.f32 %v1232, %v1251
      %v1304 = vadd.f32 %v1233, %v1251
      %v1305 = vadd.f32 %v1234, %v1251
      %v1306 = vadd.f32 %v1235, %v1251
      %v1307 = vadd.f32 %v1236, %v1251
      %v1308 = vadd.f32 %v1237, %v1251
      %v1309 = vadd.f32 %v1238, %v1251
      %v1310 = vadd.f32 %v1239, %v1251
      %v1311 = vadd.f32 %v1240, %v1251
      %v1312 = vadd.f32 %v1241, %v1251
      %v1313 = vadd.f32 %v1242, %v1251
      %v1314 = vadd.f32 %v1243, %v1251
      %v1315 = vadd.f32 %v1244, %v1251
      %v1316 = vadd.f32 %v1245, %v1251
      %v1317 = vmax.f32 %v1253, 0.0
      %v1318 = vmax.f32 %v1254, 0.0
      %v1319 = vmax.f32 %v1255, 0.0
      %v1320 = vmax.f32 %v1256, 0.0
      %v1321 = vmax.f32 %v1257, 0.0
      %v1322 = vmax.f32 %v1258, 0.0
      %v1323 = vmax.f32 %v1259, 0.0
      %v1324 = vmax.f32 %v1260, 0.0
      %v1325 = vmax.f32 %v1261, 0.0
      %v1326 = vmax.f32 %v1262, 0.0
      %v1327 = vmax.f32 %v1263, 0.0
      %v1328 = vmax.f32 %v1264, 0.0
      %v1329 = vmax.f32 %v1265, 0.0
      %v1330 = vmax.f32 %v1266, 0.0
      %v1331 = vmax.f32 %v1267, 0.0
      %v1332 = vmax.f32 %v1268, 0.0
      %v1333 = vmax.f32 %v1269, 0.0
      %v1334 = vmax.f32 %v1270, 0.0
      %v1335 = vmax.f32 %v1271, 0.0
      %v1336 = vmax.f32 %v1272, 0.0
      %v1337 = vmax.f32 %v1273, 0.0
      %v1338 = vmax.f32 %v1274, 0.0
      %v1339 = vmax.f32 %v1275, 0.0
      %v1340 = vmax.f32 %v1276, 0.0
      %v1341 = vmax.f32 %v1277, 0.0
      %v1342 = vmax.f32 %v1278, 0.0
      %v1343 = vmax.f32 %v1279, 0.0
      %v1344 = vmax.f32 %v1280, 0.0
      %v1345 = vmax.f32 %v1281, 0.0
      %v1346 = vmax.f32 %v1282, 0.0
      %v1347 = vmax.f32 %v1283, 0.0
      %v1348 = vmax.f32 %v1284, 0.0
      %v1349 = vmax.f32 %v1285, 0.0
      %v1350 = vmax.f32 %v1286, 0.0
      %v1351 = vmax.f32 %v1287, 0.0
      %v1352 = vmax.f32 %v1288, 0.0
      %v1353 = vmax.f32 %v1289, 0.0
      %v1354 = vmax.f32 %v1290, 0.0
      %v1355 = vmax.f32 %v1291, 0.0
      %v1356 = vmax.f32 %v1292, 0.0
      %v1357 = vmax.f32 %v1293, 0.0
      %v1358 = vmax.f32 %v1294, 0.0
      %v1359 = vmax.f32 %v1295, 0.0
      %v1360 = vmax.f32 %v1296, 0.0
      %v1361 = vmax.f32 %v1297, 0.0
      %v1362 = vmax.f32 %v1298, 0.0
      %v1363 = vmax.f32 %v1299, 0.0
      %v1364 = vmax.f32 %v1300, 0.0
      %v1365 = vmax.f32 %v1301, 0.0
      %v1366 = vmax.f32 %v1302, 0.0
      %v1367 = vmax.f32 %v1303, 0.0
      %v1368 = vmax.f32 %v1304, 0.0
      %v1369 = vmax.f32 %v1305, 0.0
      %v1370 = vmax.f32 %v1306, 0.0
      %v1371 = vmax.f32 %v1307, 0.0
      %v1372 = vmax.f32 %v1308, 0.0
      %v1373 = vmax.f32 %v1309, 0.0
      %v1374 = vmax.f32 %v1310, 0.0
      %v1375 = vmax.f32 %v1311, 0.0
      %v1376 = vmax.f32 %v1312, 0.0
      %v1377 = vmax.f32 %v1313, 0.0
      %v1378 = vmax.f32 %v1314, 0.0
      %v1379 = vmax.f32 %v1315, 0.0
      %v1380 = vmax.f32 %v1316, 0.0
      %v1381 = vpack.c.bf16 %v1318, %v1317
      %v1382 = vpack.c.bf16 %v1320, %v1319
      %v1383 = vpack.c.bf16 %v1322, %v1321
      %v1384 = vpack.c.bf16 %v1324, %v1323
      %v1385 = vpack.c.bf16 %v1326, %v1325
      %v1386 = vpack.c.bf16 %v1328, %v1327
      %v1387 = vpack.c.bf16 %v1330, %v1329
      %v1388 = vpack.c.bf16 %v1332, %v1331
      %v1389 = vpack.c.bf16 %v1334, %v1333
      %v1390 = vpack.c.bf16 %v1336, %v1335
      %v1391 = vpack.c.bf16 %v1338, %v1337
      %v1392 = vpack.c.bf16 %v1340, %v1339
      %v1393 = vpack.c.bf16 %v1342, %v1341
      %v1394 = vpack.c.bf16 %v1344, %v1343
      %v1395 = vpack.c.bf16 %v1346, %v1345
      %v1396 = vpack.c.bf16 %v1348, %v1347
      %v1397 = vpack.c.bf16 %v1350, %v1349
      %v1398 = vpack.c.bf16 %v1352, %v1351
      %v1399 = vpack.c.bf16 %v1354, %v1353
      %v1400 = vpack.c.bf16 %v1356, %v1355
      %v1401 = vpack.c.bf16 %v1358, %v1357
      %v1402 = vpack.c.bf16 %v1360, %v1359
      %v1403 = vpack.c.bf16 %v1362, %v1361
      %v1404 = vpack.c.bf16 %v1364, %v1363
      %v1405 = vpack.c.bf16 %v1366, %v1365
      %v1406 = vpack.c.bf16 %v1368, %v1367
      %v1407 = vpack.c.bf16 %v1370, %v1369
      %v1408 = vpack.c.bf16 %v1372, %v1371
      %v1409 = vpack.c.bf16 %v1374, %v1373
      %v1410 = vpack.c.bf16 %v1376, %v1375
      %v1411 = vpack.c.bf16 %v1378, %v1377
      %v1412 = vpack.c.bf16 %v1380, %v1379
      %v1445 = vunpack.c.l.b16 %v1381
      %v1446 = vunpack.c.h.b16 %v1381
      %v1447 = vunpack.c.l.b16 %v1382
      %v1448 = vunpack.c.h.b16 %v1382
      %v1449 = vunpack.c.l.b16 %v1383
      %v1450 = vunpack.c.h.b16 %v1383
      %v1451 = vunpack.c.l.b16 %v1384
      %v1452 = vunpack.c.h.b16 %v1384
      %v1453 = vunpack.c.l.b16 %v1385
      %v1454 = vunpack.c.h.b16 %v1385
      %v1455 = vunpack.c.l.b16 %v1386
      %v1456 = vunpack.c.h.b16 %v1386
      %v1457 = vunpack.c.l.b16 %v1387
      %v1458 = vunpack.c.h.b16 %v1387
      %v1459 = vunpack.c.l.b16 %v1388
      %v1460 = vunpack.c.h.b16 %v1388
      %v1461 = vunpack.c.l.b16 %v1389
      %v1462 = vunpack.c.h.b16 %v1389
      %v1463 = vunpack.c.l.b16 %v1390
      %v1464 = vunpack.c.h.b16 %v1390
      %v1465 = vunpack.c.l.b16 %v1391
      %v1466 = vunpack.c.h.b16 %v1391
      %v1467 = vunpack.c.l.b16 %v1392
      %v1468 = vunpack.c.h.b16 %v1392
      %v1469 = vunpack.c.l.b16 %v1393
      %v1470 = vunpack.c.h.b16 %v1393
      %v1471 = vunpack.c.l.b16 %v1394
      %v1472 = vunpack.c.h.b16 %v1394
      %v1473 = vunpack.c.l.b16 %v1395
      %v1474 = vunpack.c.h.b16 %v1395
      %v1475 = vunpack.c.l.b16 %v1396
      %v1476 = vunpack.c.h.b16 %v1396
      %v1477 = vunpack.c.l.b16 %v1397
      %v1478 = vunpack.c.h.b16 %v1397
      %v1479 = vunpack.c.l.b16 %v1398
      %v1480 = vunpack.c.h.b16 %v1398
      %v1481 = vunpack.c.l.b16 %v1399
      %v1482 = vunpack.c.h.b16 %v1399
      %v1483 = vunpack.c.l.b16 %v1400
      %v1484 = vunpack.c.h.b16 %v1400
      %v1485 = vunpack.c.l.b16 %v1401
      %v1486 = vunpack.c.h.b16 %v1401
      %v1487 = vunpack.c.l.b16 %v1402
      %v1488 = vunpack.c.h.b16 %v1402
      %v1489 = vunpack.c.l.b16 %v1403
      %v1490 = vunpack.c.h.b16 %v1403
      %v1491 = vunpack.c.l.b16 %v1404
      %v1492 = vunpack.c.h.b16 %v1404
      %v1493 = vunpack.c.l.b16 %v1405
      %v1494 = vunpack.c.h.b16 %v1405
      %v1495 = vunpack.c.l.b16 %v1406
      %v1496 = vunpack.c.h.b16 %v1406
      %v1497 = vunpack.c.l.b16 %v1407
      %v1498 = vunpack.c.h.b16 %v1407
      %v1499 = vunpack.c.l.b16 %v1408
      %v1500 = vunpack.c.h.b16 %v1408
      %v1501 = vunpack.c.l.b16 %v1409
      %v1502 = vunpack.c.h.b16 %v1409
      %v1503 = vunpack.c.l.b16 %v1410
      %v1504 = vunpack.c.h.b16 %v1410
      %v1505 = vunpack.c.l.b16 %v1411
      %v1506 = vunpack.c.h.b16 %v1411
      %v1507 = vunpack.c.l.b16 %v1412
      %v1508 = vunpack.c.h.b16 %v1412
      %v1509 = vpack.c.b16 %v1445, %v1445
      %v1510 = vpack.c.b16 %v1446, %v1446
      %v1511 = vpack.c.b16 %v1447, %v1447
      %v1512 = vpack.c.b16 %v1448, %v1448
      %v1513 = vpack.c.b16 %v1449, %v1449
      %v1514 = vpack.c.b16 %v1450, %v1450
      %v1515 = vpack.c.b16 %v1451, %v1451
      %v1516 = vpack.c.b16 %v1452, %v1452
      %v1517 = vpack.c.b16 %v1453, %v1453
      %v1518 = vpack.c.b16 %v1454, %v1454
      %v1519 = vpack.c.b16 %v1455, %v1455
      %v1520 = vpack.c.b16 %v1456, %v1456
      %v1521 = vpack.c.b16 %v1457, %v1457
      %v1522 = vpack.c.b16 %v1458, %v1458
      %v1523 = vpack.c.b16 %v1459, %v1459
      %v1524 = vpack.c.b16 %v1460, %v1460
      %v1525 = vpack.c.b16 %v1461, %v1461
      %v1526 = vpack.c.b16 %v1462, %v1462
      %v1527 = vpack.c.b16 %v1463, %v1463
      %v1528 = vpack.c.b16 %v1464, %v1464
      %v1529 = vpack.c.b16 %v1465, %v1465
      %v1530 = vpack.c.b16 %v1466, %v1466
      %v1531 = vpack.c.b16 %v1467, %v1467
      %v1532 = vpack.c.b16 %v1468, %v1468
      %v1533 = vpack.c.b16 %v1469, %v1469
      %v1534 = vpack.c.b16 %v1470, %v1470
      %v1535 = vpack.c.b16 %v1471, %v1471
      %v1536 = vpack.c.b16 %v1472, %v1472
      %v1537 = vpack.c.b16 %v1473, %v1473
      %v1538 = vpack.c.b16 %v1474, %v1474
      %v1539 = vpack.c.b16 %v1475, %v1475
      %v1540 = vpack.c.b16 %v1476, %v1476
      %v1541 = vpack.c.b16 %v1477, %v1477
      %v1542 = vpack.c.b16 %v1478, %v1478
      %v1543 = vpack.c.b16 %v1479, %v1479
      %v1544 = vpack.c.b16 %v1480, %v1480
      %v1545 = vpack.c.b16 %v1481, %v1481
      %v1546 = vpack.c.b16 %v1482, %v1482
      %v1547 = vpack.c.b16 %v1483, %v1483
      %v1548 = vpack.c.b16 %v1484, %v1484
      %v1549 = vpack.c.b16 %v1485, %v1485
      %v1550 = vpack.c.b16 %v1486, %v1486
      %v1551 = vpack.c.b16 %v1487, %v1487
      %v1552 = vpack.c.b16 %v1488, %v1488
      %v1553 = vpack.c.b16 %v1489, %v1489
      %v1554 = vpack.c.b16 %v1490, %v1490
      %v1555 = vpack.c.b16 %v1491, %v1491
      %v1556 = vpack.c.b16 %v1492, %v1492
      %v1557 = vpack.c.b16 %v1493, %v1493
      %v1558 = vpack.c.b16 %v1494, %v1494
      %v1559 = vpack.c.b16 %v1495, %v1495
      %v1560 = vpack.c.b16 %v1496, %v1496
      %v1561 = vpack.c.b16 %v1497, %v1497
      %v1562 = vpack.c.b16 %v1498, %v1498
      %v1563 = vpack.c.b16 %v1499, %v1499
      %v1564 = vpack.c.b16 %v1500, %v1500
      %v1565 = vpack.c.b16 %v1501, %v1501
      %v1566 = vpack.c.b16 %v1502, %v1502
      %v1567 = vpack.c.b16 %v1503, %v1503
      %v1568 = vpack.c.b16 %v1504, %v1504
      %v1569 = vpack.c.b16 %v1505, %v1505
      %v1570 = vpack.c.b16 %v1506, %v1506
      %v1571 = vpack.c.b16 %v1507, %v1507
      %v1572 = vpack.c.b16 %v1508, %v1508
      %1637 = vst [vmem:[#allocation8] sm:$0xf] %v1509
      %1638 = vst [vmem:[#allocation8 + $0x4] sm:$0xf] %v1510
      %1639 = vst [vmem:[#allocation8 + $0x8] sm:$0xf] %v1511
      %1640 = vst [vmem:[#allocation8 + $0xc] sm:$0xf] %v1512
      %1641 = vst [vmem:[#allocation8 + $0x10] sm:$0xf] %v1513
      %1642 = vst [vmem:[#allocation8 + $0x14] sm:$0xf] %v1514
      %1643 = vst [vmem:[#allocation8 + $0x18] sm:$0xf] %v1515
      %1644 = vst [vmem:[#allocation8 + $0x1c] sm:$0xf] %v1516
      %1645 = vst [vmem:[#allocation8 + $0x20] sm:$0xf] %v1517
      %1646 = vst [vmem:[#allocation8 + $0x24] sm:$0xf] %v1518
      %1647 = vst [vmem:[#allocation8 + $0x28] sm:$0xf] %v1519
      %1648 = vst [vmem:[#allocation8 + $0x2c] sm:$0xf] %v1520
      %1649 = vst [vmem:[#allocation8 + $0x30] sm:$0xf] %v1521
      %1650 = vst [vmem:[#allocation8 + $0x34] sm:$0xf] %v1522
      %1651 = vst [vmem:[#allocation8 + $0x38] sm:$0xf] %v1523
      %1652 = vst [vmem:[#allocation8 + $0x3c] sm:$0xf] %v1524
      %1653 = vst [vmem:[#allocation8 + $0x40] sm:$0xf] %v1525
      %1654 = vst [vmem:[#allocation8 + $0x44] sm:$0xf] %v1526
      %1655 = vst [vmem:[#allocation8 + $0x48] sm:$0xf] %v1527
      %1656 = vst [vmem:[#allocation8 + $0x4c] sm:$0xf] %v1528
      %1657 = vst [vmem:[#allocation8 + $0x50] sm:$0xf] %v1529
      %1658 = vst [vmem:[#allocation8 + $0x54] sm:$0xf] %v1530
      %1659 = vst [vmem:[#allocation8 + $0x58] sm:$0xf] %v1531
      %1660 = vst [vmem:[#allocation8 + $0x5c] sm:$0xf] %v1532
      %1661 = vst [vmem:[#allocation8 + $0x60] sm:$0xf] %v1533
      %1662 = vst [vmem:[#allocation8 + $0x64] sm:$0xf] %v1534
      %1663 = vst [vmem:[#allocation8 + $0x68] sm:$0xf] %v1535
      %1664 = vst [vmem:[#allocation8 + $0x6c] sm:$0xf] %v1536
      %1665 = vst [vmem:[#allocation8 + $0x70] sm:$0xf] %v1537
      %1666 = vst [vmem:[#allocation8 + $0x74] sm:$0xf] %v1538
      %1667 = vst [vmem:[#allocation8 + $0x78] sm:$0xf] %v1539
      %1668 = vst [vmem:[#allocation8 + $0x7c] sm:$0xf] %v1540
      %1669 = vst [vmem:[#allocation8 + $0x80] sm:$0xf] %v1541
      %1670 = vst [vmem:[#allocation8 + $0x84] sm:$0xf] %v1542
      %1671 = vst [vmem:[#allocation8 + $0x88] sm:$0xf] %v1543
      %1672 = vst [vmem:[#allocation8 + $0x8c] sm:$0xf] %v1544
      %1673 = vst [vmem:[#allocation8 + $0x90] sm:$0xf] %v1545
      %1674 = vst [vmem:[#allocation8 + $0x94] sm:$0xf] %v1546
      %1675 = vst [vmem:[#allocation8 + $0x98] sm:$0xf] %v1547
      %1676 = vst [vmem:[#allocation8 + $0x9c] sm:$0xf] %v1548
      %1677 = vst [vmem:[#allocation8 + $0xa0] sm:$0xf] %v1549
      %1678 = vst [vmem:[#allocation8 + $0xa4] sm:$0xf] %v1550
      %1679 = vst [vmem:[#allocation8 + $0xa8] sm:$0xf] %v1551
      %1680 = vst [vmem:[#allocation8 + $0xac] sm:$0xf] %v1552
      %1681 = vst [vmem:[#allocation8 + $0xb0] sm:$0xf] %v1553
      %1682 = vst [vmem:[#allocation8 + $0xb4] sm:$0xf] %v1554
      %1683 = vst [vmem:[#allocation8 + $0xb8] sm:$0xf] %v1555
      %1684 = vst [vmem:[#allocation8 + $0xbc] sm:$0xf] %v1556
      %1685 = vst [vmem:[#allocation8 + $0xc0] sm:$0xf] %v1557
      %1686 = vst [vmem:[#allocation8 + $0xc4] sm:$0xf] %v1558
      %1687 = vst [vmem:[#allocation8 + $0xc8] sm:$0xf] %v1559
      %1688 = vst [vmem:[#allocation8 + $0xcc] sm:$0xf] %v1560
      %1689 = vst [vmem:[#allocation8 + $0xd0] sm:$0xf] %v1561
      %1690 = vst [vmem:[#allocation8 + $0xd4] sm:$0xf] %v1562
      %1691 = vst [vmem:[#allocation8 + $0xd8] sm:$0xf] %v1563
      %1692 = vst [vmem:[#allocation8 + $0xdc] sm:$0xf] %v1564
      %1693 = vst [vmem:[#allocation8 + $0xe0] sm:$0xf] %v1565
      %1694 = vst [vmem:[#allocation8 + $0xe4] sm:$0xf] %v1566
      %1695 = vst [vmem:[#allocation8 + $0xe8] sm:$0xf] %v1567
      %1696 = vst [vmem:[#allocation8 + $0xec] sm:$0xf] %v1568
      %1697 = vst [vmem:[#allocation8 + $0xf0] sm:$0xf] %v1569
      %1698 = vst [vmem:[#allocation8 + $0xf4] sm:$0xf] %v1570
      %1699 = vst [vmem:[#allocation8 + $0xf8] sm:$0xf] %v1571
      %1700 = vst [vmem:[#allocation8 + $0xfc] sm:$0xf] %v1572
    $region33: #{tpu_custom_call.1} parent=1 // pred_fallthru
      _
    // Predicated region
    $region34: #{tpu_custom_call.1} parent=1 // pred_check
      _
    $region35: #{tpu_custom_call.1} parent=1 // pred_check_branch
      %1702 = sbr.rel (0) target = $region37
    $region36: #{tpu_custom_call.1} parent=1 // pred_region
      %s1704 = ssub.s32 4096, 4096
      %1705 = vsyncadd [#allocation5], %s1704
      %s1706 = sshll.u32 [#allocation8], 4
      %s1707 = int_to_ptr.vmem [resolvable:$true] %s1706
      %1712 = dma.vmem_to_hbm [thread:$0]  %s1707, 4096, %s4, [#allocation5], 64, 64, 4
    $region37: #{tpu_custom_call.1} parent=1 // pred_fallthru
      _
    // Predicated region
    $region38: #{tpu_custom_call.1} parent=1 // pred_check
      _
    $region39: #{tpu_custom_call.1} parent=1 // pred_check_branch
      %1714 = sbr.rel (0) target = $region41
    $region40: #{tpu_custom_call.1} parent=1 // pred_region
      %1715 = dma.done [#allocation5], 4096
    $region41: #{tpu_custom_call.1} parent=1 // pred_fallthru
      _
    %1716 = vsyncpa [#allocation4], 1
    %1717 = vsyncpa [#allocation7], 1
    %1718 = vsyncpa [#allocation5], 1

</llo_original>
